<compile_context>
chip_gen: v7x
topology: tpu7x:2x2x1
jax: 0.10.0
libtpu: 0.0.40
codegen_flags: <defaults>
</compile_context>

<pallas_src>
import functools

import jax
import jax.numpy as jnp
from jax import lax
from jax.experimental import pallas as pl
from jax.experimental.pallas import tpu as pltpu


# ----------------------------------------------------------------------------
# AUGRU recurrence kernel: one time-chunk, hidden state carried in VMEM scratch.
# ----------------------------------------------------------------------------
def _augru_kernel(gi_ref, score_ref, seqlen_ref, whh_ref, out_ref, h_ref, *,
                  hidden, batch_on_lanes, hoist_whh, unroll):
    """
    batch-on-sublanes layout (batch_on_lanes=False):
      gi_ref    : [Tc, 3, B, H]  bf16   x @ W_g^T + b_g, gate-major
      score_ref : [Tc, B, 1]     f32    attention scores
      seqlen_ref: [B, 1]         int32  sequence lengths
      whh_ref   : [H, 3H]        f32    u.T (fused recurrent weights)
      out_ref   : [Tc, B, H]     f32    time-major output (zeroed at t >= seq_len)
      h_ref     : [B, H]         f32    carried hidden state (scratch)
    batch-on-lanes layout (batch_on_lanes=True): every [B, H] above becomes [H, B],
      gi is [Tc, 3, H, B], score [Tc, 1, B], seqlen [1, B], whh is u ([3H, H]).
    """
    H = hidden
    Tc = out_ref.shape[0]
    chunk = pl.program_id(0)
    t_base = chunk * Tc

    @pl.when(chunk == 0)
    def _():
        h_ref[...] = jnp.zeros_like(h_ref)

    seqlen = seqlen_ref[...]
    whh_hoisted = whh_ref[...] if hoist_whh else None

    def sigmoid(x):
        # One EUP transcendental instead of exp + divide.
        return 0.5 * (jnp.tanh(0.5 * x) + 1.0)

    def step(t, h):
        whh = whh_hoisted if hoist_whh else whh_ref[...]
        if batch_on_lanes:
            hx = jnp.dot(whh, h, preferred_element_type=jnp.float32)   # [3H, B]
            hu, hr, hz = hx[0:H], hx[H:2 * H], hx[2 * H:3 * H]
        else:
            hx = jnp.dot(h, whh, preferred_element_type=jnp.float32)   # [B, 3H]
            hu, hr, hz = hx[:, 0:H], hx[:, H:2 * H], hx[:, 2 * H:3 * H]

        gi_t = gi_ref[t].astype(jnp.float32)        # [3, B, H] or [3, H, B]
        xu, xr, xz = gi_t[0], gi_t[1], gi_t[2]

        u_gate = sigmoid(xu + hu)                   # biases already folded into gi
        r_gate = sigmoid(xr + hr)
        z_cand = jnp.tanh(xz + hz * r_gate)

        a = score_ref[t]                            # [B, 1] or [1, B]
        u_gate = a * u_gate
        h_new = (1.0 - u_gate) * h + u_gate * z_cand

        valid = (seqlen > (t_base + t)).astype(jnp.float32)
        out_ref[t] = (h_new * valid).astype(out_ref.dtype)
        return h_new

    h_ref[...] = lax.fori_loop(0, Tc, step, h_ref[...], unroll=unroll)


def _largest_divisor_leq(n, cap):
    cap = max(1, min(n, cap))
    for d in range(cap, 0, -1):
        if n % d == 0:
            return d
    return 1


# ----------------------------------------------------------------------------
# Wrapper: hoisted input projection + time-chunked pallas_call + layout glue.
# ----------------------------------------------------------------------------
def dynamic_augru_forward(gru_x, att_score, seq_len, params, *, batch_on_lanes=None):
    """gru_x: [B, T, D] f32, att_score: [B, T] f32, seq_len: [B] int -> [B, T, H] f32."""
    B, T, D = gru_x.shape
    H = params["hidden_dim"]
    w, u = params["w"], params["u"]                         # [3H, D], [3H, H]

    if batch_on_lanes is None:
        # Lane-dense per-step stores: put the batch on the lane axis when H is
        # narrower than a lane and the batch is wide enough to fill 128 lanes.
        batch_on_lanes = (H < 128) and (B >= 128)

    # Hoisted input projection: single gate-major einsum (one MXU-heavy XLA op,
    # off the serial critical path), biases folded in, bf16 storage.
    w3 = w.reshape(3, H, D)
    bias = jnp.stack([params["bu"], params["br"], params["bh"]])   # [3, H]
    if batch_on_lanes:
        gi = jnp.einsum("btd,ghd->tghb", gru_x, w3) + bias[None, :, :, None]
        gi = gi.astype(jnp.bfloat16)                               # [T, 3, H, B]
        score = jnp.transpose(att_score)[:, None, :]               # [T, 1, B]
        seqlen = seq_len.astype(jnp.int32)[None, :]                # [1, B]
        whh = u                                                    # [3H, H]
    else:
        gi = jnp.einsum("btd,ghd->tgbh", gru_x, w3) + bias[None, :, None, :]
        gi = gi.astype(jnp.bfloat16)                               # [T, 3, B, H]
        score = jnp.transpose(att_score)[:, :, None]               # [T, B, 1]
        seqlen = seq_len.astype(jnp.int32)[:, None]                # [B, 1]
        whh = jnp.transpose(u)                                     # [H, 3H]

    # Time-chunk size: bound the double-buffered per-chunk streams well under the
    # scoped VMEM limit (set below) so the tile also fits v7x's 64 MiB physical VMEM.
    stream_bytes_per_t = 2 * (B * 3 * H * 2      # gi slab (bf16), double buffered
                              + B * 4            # score slab (f32)
                              + B * H * 4)       # output slab (f32)
    budget = 20 * 1024 * 1024
    Tc = _largest_divisor_leq(T, max(1, budget // stream_bytes_per_t))
    unroll = max(1, min(8, Tc))                  # partial unroll, not full-T unroll
    hoist_whh = H < 64                           # keep vreg pressure down for big H

    if batch_on_lanes:
        gi_spec = pl.BlockSpec((Tc, 3, H, B), lambda c: (c, 0, 0, 0))
        sc_spec = pl.BlockSpec((Tc, 1, B), lambda c: (c, 0, 0))
        sl_spec = pl.BlockSpec((1, B), lambda c: (0, 0))
        wh_spec = pl.BlockSpec((3 * H, H), lambda c: (0, 0))
        out_spec = pl.BlockSpec((Tc, H, B), lambda c: (c, 0, 0))
        out_shape = jax.ShapeDtypeStruct((T, H, B), jnp.float32)
        h_scratch = pltpu.VMEM((H, B), jnp.float32)
    else:
        gi_spec = pl.BlockSpec((Tc, 3, B, H), lambda c: (c, 0, 0, 0))
        sc_spec = pl.BlockSpec((Tc, B, 1), lambda c: (c, 0, 0))
        sl_spec = pl.BlockSpec((B, 1), lambda c: (0, 0))
        wh_spec = pl.BlockSpec((H, 3 * H), lambda c: (0, 0))
        out_spec = pl.BlockSpec((Tc, B, H), lambda c: (c, 0, 0))
        out_shape = jax.ShapeDtypeStruct((T, B, H), jnp.float32)
        h_scratch = pltpu.VMEM((B, H), jnp.float32)

    kernel = functools.partial(
        _augru_kernel, hidden=H, batch_on_lanes=batch_on_lanes,
        hoist_whh=hoist_whh, unroll=unroll)

    out_tm = pl.pallas_call(
        kernel,
        out_shape=out_shape,
        grid=(T // Tc,),
        in_specs=[gi_spec, sc_spec, sl_spec, wh_spec],
        out_specs=out_spec,
        scratch_shapes=[h_scratch],
        compiler_params=pltpu.CompilerParams(
            dimension_semantics=("arbitrary",),      # h is carried chunk -> chunk
            vmem_limit_bytes=32 * 1024 * 1024),
    )(gi, score, seqlen, whh)

    # Back to the PyTorch batch-first convention (single cheap transpose).
    if batch_on_lanes:
        return jnp.transpose(out_tm, (2, 0, 1))      # [T, H, B] -> [B, T, H]
    return jnp.transpose(out_tm, (1, 0, 2))          # [T, B, H] -> [B, T, H]


# ----------------------------------------------------------------------------
# Deterministic parameter init (shapes from the AUGRU module).
# ----------------------------------------------------------------------------
def init_params(key, input_dim, hidden_dim):
    ks = jax.random.split(key, 5)
    s = 0.2
    return dict(
        hidden_dim=hidden_dim,
        w=jax.random.normal(ks[0], (3 * hidden_dim, input_dim), jnp.float32) * s,
        u=jax.random.normal(ks[1], (3 * hidden_dim, hidden_dim), jnp.float32) * s,
        bu=jax.random.normal(ks[2], (hidden_dim,), jnp.float32) * s,
        br=jax.random.normal(ks[3], (hidden_dim,), jnp.float32) * s,
        bh=jax.random.normal(ks[4], (hidden_dim,), jnp.float32) * s,
    )


# ----------------------------------------------------------------------------
# Pure-JAX reference (mirrors the PyTorch AUGRU math) for a sanity check.
# ----------------------------------------------------------------------------
def reference_forward(gru_x, att_score, seq_len, params):
    B, T, D = gru_x.shape
    H = params["hidden_dim"]
    w, u = params["w"], params["u"]
    bu, br, bh = params["bu"], params["br"], params["bh"]

    def cell(h, xs):
        x_t, s_t = xs
        i_x = x_t @ w.T
        h_x = h @ u.T
        i_u, i_r, i_z = i_x[:, :H], i_x[:, H:2 * H], i_x[:, 2 * H:]
        h_u, h_r, h_z = h_x[:, :H], h_x[:, H:2 * H], h_x[:, 2 * H:]
        a = s_t[:, None]
        ug = a * jax.nn.sigmoid(i_u + h_u + bu)
        r = jax.nn.sigmoid(i_r + h_r + br)
        z = jnp.tanh(i_z + h_z * r + bh)
        h_new = (1.0 - ug) * h + ug * z
        return h_new, h_new

    xs = (jnp.transpose(gru_x, (1, 0, 2)), jnp.transpose(att_score))
    _, outs = lax.scan(cell, jnp.zeros((B, H), jnp.float32), xs)      # [T, B, H]
    valid = (jnp.arange(T)[:, None] < seq_len[None, :]).astype(jnp.float32)
    return jnp.transpose(outs * valid[:, :, None], (1, 0, 2))


if __name__ == "__main__":
    B, T, D, H = 8, 8, 16, 32

    key = jax.random.PRNGKey(0)
    k_x, k_s, k_len, k_p = jax.random.split(key, 4)

    gru_x = jax.random.normal(k_x, (B, T, D), jnp.float32)
    att_score = jax.nn.softmax(jax.random.normal(k_s, (B, T), jnp.float32), axis=-1)
    seq_len = jax.random.randint(k_len, (B,), 1, T + 1, dtype=jnp.int32)

    params = init_params(k_p, D, H)
    ref = reference_forward(gru_x, att_score, seq_len, params)

    # Default layout (batch on sublanes at this small B).
    out = dynamic_augru_forward(gru_x, att_score, seq_len, params)
    jax.block_until_ready(out)
    assert out.shape == (B, T, H)
    assert jnp.allclose(out, ref, atol=2e-2, rtol=2e-2), \
        float(jnp.max(jnp.abs(out - ref)))

    # Also exercise the lane-dense (batch-on-lanes) layout used for wide-batch DIEN shapes.
    out_bl = dynamic_augru_forward(gru_x, att_score, seq_len, params,
                                   batch_on_lanes=True)
    jax.block_until_ready(out_bl)
    assert jnp.allclose(out_bl, ref, atol=2e-2, rtol=2e-2), \
        float(jnp.max(jnp.abs(out_bl - ref)))

    print("KERNEL_OK")
</pallas_src>

<mosaic_0001>
module attributes {stable_mosaic.version = 11 : i64} {
  func.func @_augru_kernel(%arg0: i32, %arg1: memref<8x3x8x32xbf16, #tpu.memory_space<vmem>>, %arg2: memref<8x8x1xf32, #tpu.memory_space<vmem>>, %arg3: memref<8x1xi32, #tpu.memory_space<vmem>>, %arg4: memref<32x96xf32, #tpu.memory_space<vmem>>, %arg5: memref<8x8x32xf32, #tpu.memory_space<vmem>>, %arg6: memref<8x32xf32, #tpu.memory_space<vmem>>) attributes {dimension_semantics = [#tpu.dimension_semantics<arbitrary>], iteration_bounds = array<i64: 1>, scalar_prefetch = 0 : i64, scratch_operands = 1 : i64, tpu.core_type = #tpu.core_type<tc>, window_params = [{transform_indices = @transform_0, window_bounds = array<i64: 8, 3, 8, 32>}, {transform_indices = @transform_1, window_bounds = array<i64: 8, 8, 1>}, {pipeline_mode = #tpu.pipeline_mode<synchronous>, transform_indices = @transform_2, window_bounds = array<i64: 8, 1>}, {pipeline_mode = #tpu.pipeline_mode<synchronous>, transform_indices = @transform_3, window_bounds = array<i64: 32, 96>}, {transform_indices = @transform_4, window_bounds = array<i64: 8, 8, 32>}]} {
    %c8_i32 = arith.constant 8 : i32
    %0 = arith.muli %arg0, %c8_i32 : i32
    %c0_i32 = arith.constant 0 : i32
    %1 = arith.cmpi eq, %arg0, %c0_i32 : i32
    %2 = arith.extui %1 : i1 to i32
    %c0_i32_0 = arith.constant 0 : i32
    %3 = arith.cmpi ne, %2, %c0_i32_0 : i32
    scf.if %3 {
      %cst_129 = arith.constant 0.000000e+00 : f32
      %440 = vector.broadcast %cst_129 : f32 to vector<8x32xf32>
      %c0_130 = arith.constant 0 : index
      %c0_131 = arith.constant 0 : index
      %441 = vector.load %arg6[%c0_130, %c0_131] : memref<8x32xf32, #tpu.memory_space<vmem>>, vector<8x32xf32>
      tpu.vector_store %arg6[%c0_130, %c0_131], %440 {strides = array<i32>} : memref<8x32xf32, #tpu.memory_space<vmem>>, vector<8x32xf32>,
    } else {
    }
    %c0 = arith.constant 0 : index
    %c0_1 = arith.constant 0 : index
    %4 = vector.load %arg3[%c0, %c0_1] : memref<8x1xi32, #tpu.memory_space<vmem>>, vector<8x1xi32>
    %c0_2 = arith.constant 0 : index
    %c0_3 = arith.constant 0 : index
    %5 = vector.load %arg4[%c0_2, %c0_3] : memref<32x96xf32, #tpu.memory_space<vmem>>, vector<32x96xf32>
    %c0_4 = arith.constant 0 : index
    %c0_5 = arith.constant 0 : index
    %6 = vector.load %arg6[%c0_4, %c0_5] : memref<8x32xf32, #tpu.memory_space<vmem>>, vector<8x32xf32>
    %c0_i32_6 = arith.constant 0 : i32
    %cst = arith.constant dense<0.000000e+00> : vector<8x96xf32>
    %7 = tpu.matmul %6, %5, %cst {dimension_numbers = #tpu.dot_dimension_numbers<[1], [0], [0], [1], [0, 0, 1, 1], [], []>} : vector<8x32xf32>, vector<32x96xf32>, vector<8x96xf32> -> vector<8x96xf32>
    %8 = vector.extract_strided_slice %7 {offsets = [0, 0], sizes = [8, 32], strides = [1, 1]} : vector<8x96xf32> to vector<8x32xf32>
    %9 = vector.extract_strided_slice %7 {offsets = [0, 32], sizes = [8, 32], strides = [1, 1]} : vector<8x96xf32> to vector<8x32xf32>
    %10 = vector.extract_strided_slice %7 {offsets = [0, 64], sizes = [8, 32], strides = [1, 1]} : vector<8x96xf32> to vector<8x32xf32>
    %11 = arith.index_cast %c0_i32_6 : i32 to index
    %c0_7 = arith.constant 0 : index
    %c0_8 = arith.constant 0 : index
    %c0_9 = arith.constant 0 : index
    %12 = vector.load %arg1[%11, %c0_7, %c0_8, %c0_9] : memref<8x3x8x32xbf16, #tpu.memory_space<vmem>>, vector<1x3x8x32xbf16>
    %13 = vector.shape_cast %12 : vector<1x3x8x32xbf16> to vector<3x8x32xbf16>
    %14 = arith.extf %13 : vector<3x8x32xbf16> to vector<3x8x32xf32>
    %15 = vector.extract_strided_slice %14 {offsets = [0, 0, 0], sizes = [1, 8, 32], strides = [1, 1, 1]} : vector<3x8x32xf32> to vector<1x8x32xf32>
    %16 = vector.shape_cast %15 : vector<1x8x32xf32> to vector<8x32xf32>
    %17 = vector.extract_strided_slice %14 {offsets = [1, 0, 0], sizes = [1, 8, 32], strides = [1, 1, 1]} : vector<3x8x32xf32> to vector<1x8x32xf32>
    %18 = vector.shape_cast %17 : vector<1x8x32xf32> to vector<8x32xf32>
    %19 = vector.extract_strided_slice %14 {offsets = [2, 0, 0], sizes = [1, 8, 32], strides = [1, 1, 1]} : vector<3x8x32xf32> to vector<1x8x32xf32>
    %20 = vector.shape_cast %19 : vector<1x8x32xf32> to vector<8x32xf32>
    %21 = arith.addf %16, %8 : vector<8x32xf32>
    %cst_10 = arith.constant 5.000000e-01 : f32
    %22 = vector.broadcast %cst_10 : f32 to vector<8x32xf32>
    %23 = arith.mulf %22, %21 : vector<8x32xf32>
    %24 = math.tanh %23 : vector<8x32xf32>
    %cst_11 = arith.constant 1.000000e+00 : f32
    %25 = vector.broadcast %cst_11 : f32 to vector<8x32xf32>
    %26 = arith.addf %24, %25 : vector<8x32xf32>
    %cst_12 = arith.constant 5.000000e-01 : f32
    %27 = vector.broadcast %cst_12 : f32 to vector<8x32xf32>
    %28 = arith.mulf %27, %26 : vector<8x32xf32>
    %29 = arith.addf %18, %9 : vector<8x32xf32>
    %cst_13 = arith.constant 5.000000e-01 : f32
    %30 = vector.broadcast %cst_13 : f32 to vector<8x32xf32>
    %31 = arith.mulf %30, %29 : vector<8x32xf32>
    %32 = math.tanh %31 : vector<8x32xf32>
    %cst_14 = arith.constant 1.000000e+00 : f32
    %33 = vector.broadcast %cst_14 : f32 to vector<8x32xf32>
    %34 = arith.addf %32, %33 : vector<8x32xf32>
    %cst_15 = arith.constant 5.000000e-01 : f32
    %35 = vector.broadcast %cst_15 : f32 to vector<8x32xf32>
    %36 = arith.mulf %35, %34 : vector<8x32xf32>
    %37 = arith.mulf %10, %36 : vector<8x32xf32>
    %38 = arith.addf %20, %37 : vector<8x32xf32>
    %39 = math.tanh %38 : vector<8x32xf32>
    %40 = arith.index_cast %c0_i32_6 : i32 to index
    %c0_16 = arith.constant 0 : index
    %c0_17 = arith.constant 0 : index
    %41 = vector.load %arg2[%40, %c0_16, %c0_17] : memref<8x8x1xf32, #tpu.memory_space<vmem>>, vector<1x8x1xf32>
    %42 = vector.shape_cast %41 : vector<1x8x1xf32> to vector<8x1xf32>
    %43 = vector.broadcast %42 : vector<8x1xf32> to vector<8x32xf32>
    %44 = arith.mulf %43, %28 : vector<8x32xf32>
    %cst_18 = arith.constant 1.000000e+00 : f32
    %45 = vector.broadcast %cst_18 : f32 to vector<8x32xf32>
    %46 = arith.subf %45, %44 : vector<8x32xf32>
    %47 = arith.mulf %46, %6 : vector<8x32xf32>
    %48 = arith.mulf %44, %39 : vector<8x32xf32>
    %49 = arith.addf %47, %48 : vector<8x32xf32>
    %50 = arith.addi %0, %c0_i32_6 : i32
    %51 = vector.broadcast %50 : i32 to vector<8x1xi32>
    %52 = arith.cmpi sgt, %4, %51 : vector<8x1xi32>
    %53 = arith.extui %52 : vector<8x1xi1> to vector<8x1xi32>
    %54 = arith.sitofp %53 : vector<8x1xi32> to vector<8x1xf32>
    %55 = vector.broadcast %54 : vector<8x1xf32> to vector<8x32xf32>
    %56 = arith.mulf %49, %55 : vector<8x32xf32>
    %57 = arith.index_cast %c0_i32_6 : i32 to index
    %c0_19 = arith.constant 0 : index
    %c0_20 = arith.constant 0 : index
    %58 = vector.load %arg5[%57, %c0_19, %c0_20] : memref<8x8x32xf32, #tpu.memory_space<vmem>>, vector<1x8x32xf32>
    %59 = vector.shape_cast %58 : vector<1x8x32xf32> to vector<8x32xf32>
    %60 = vector.shape_cast %56 : vector<8x32xf32> to vector<1x8x32xf32>
    tpu.vector_store %arg5[%57, %c0_19, %c0_20], %60 {strides = array<i32>} : memref<8x8x32xf32, #tpu.memory_space<vmem>>, vector<1x8x32xf32>,
    %c1_i32 = arith.constant 1 : i32
    %cst_21 = arith.constant dense<0.000000e+00> : vector<8x96xf32>
    %61 = tpu.matmul %49, %5, %cst_21 {dimension_numbers = #tpu.dot_dimension_numbers<[1], [0], [0], [1], [0, 0, 1, 1], [], []>} : vector<8x32xf32>, vector<32x96xf32>, vector<8x96xf32> -> vector<8x96xf32>
    %62 = vector.extract_strided_slice %61 {offsets = [0, 0], sizes = [8, 32], strides = [1, 1]} : vector<8x96xf32> to vector<8x32xf32>
    %63 = vector.extract_strided_slice %61 {offsets = [0, 32], sizes = [8, 32], strides = [1, 1]} : vector<8x96xf32> to vector<8x32xf32>
    %64 = vector.extract_strided_slice %61 {offsets = [0, 64], sizes = [8, 32], strides = [1, 1]} : vector<8x96xf32> to vector<8x32xf32>
    %65 = arith.index_cast %c1_i32 : i32 to index
    %c0_22 = arith.constant 0 : index
    %c0_23 = arith.constant 0 : index
    %c0_24 = arith.constant 0 : index
    %66 = vector.load %arg1[%65, %c0_22, %c0_23, %c0_24] : memref<8x3x8x32xbf16, #tpu.memory_space<vmem>>, vector<1x3x8x32xbf16>
    %67 = vector.shape_cast %66 : vector<1x3x8x32xbf16> to vector<3x8x32xbf16>
    %68 = arith.extf %67 : vector<3x8x32xbf16> to vector<3x8x32xf32>
    %69 = vector.extract_strided_slice %68 {offsets = [0, 0, 0], sizes = [1, 8, 32], strides = [1, 1, 1]} : vector<3x8x32xf32> to vector<1x8x32xf32>
    %70 = vector.shape_cast %69 : vector<1x8x32xf32> to vector<8x32xf32>
    %71 = vector.extract_strided_slice %68 {offsets = [1, 0, 0], sizes = [1, 8, 32], strides = [1, 1, 1]} : vector<3x8x32xf32> to vector<1x8x32xf32>
    %72 = vector.shape_cast %71 : vector<1x8x32xf32> to vector<8x32xf32>
    %73 = vector.extract_strided_slice %68 {offsets = [2, 0, 0], sizes = [1, 8, 32], strides = [1, 1, 1]} : vector<3x8x32xf32> to vector<1x8x32xf32>
    %74 = vector.shape_cast %73 : vector<1x8x32xf32> to vector<8x32xf32>
    %75 = arith.addf %70, %62 : vector<8x32xf32>
    %cst_25 = arith.constant 5.000000e-01 : f32
    %76 = vector.broadcast %cst_25 : f32 to vector<8x32xf32>
    %77 = arith.mulf %76, %75 : vector<8x32xf32>
    %78 = math.tanh %77 : vector<8x32xf32>
    %cst_26 = arith.constant 1.000000e+00 : f32
    %79 = vector.broadcast %cst_26 : f32 to vector<8x32xf32>
    %80 = arith.addf %78, %79 : vector<8x32xf32>
    %cst_27 = arith.constant 5.000000e-01 : f32
    %81 = vector.broadcast %cst_27 : f32 to vector<8x32xf32>
    %82 = arith.mulf %81, %80 : vector<8x32xf32>
    %83 = arith.addf %72, %63 : vector<8x32xf32>
    %cst_28 = arith.constant 5.000000e-01 : f32
    %84 = vector.broadcast %cst_28 : f32 to vector<8x32xf32>
    %85 = arith.mulf %84, %83 : vector<8x32xf32>
    %86 = math.tanh %85 : vector<8x32xf32>
    %cst_29 = arith.constant 1.000000e+00 : f32
    %87 = vector.broadcast %cst_29 : f32 to vector<8x32xf32>
    %88 = arith.addf %86, %87 : vector<8x32xf32>
    %cst_30 = arith.constant 5.000000e-01 : f32
    %89 = vector.broadcast %cst_30 : f32 to vector<8x32xf32>
    %90 = arith.mulf %89, %88 : vector<8x32xf32>
    %91 = arith.mulf %64, %90 : vector<8x32xf32>
    %92 = arith.addf %74, %91 : vector<8x32xf32>
    %93 = math.tanh %92 : vector<8x32xf32>
    %94 = arith.index_cast %c1_i32 : i32 to index
    %c0_31 = arith.constant 0 : index
    %c0_32 = arith.constant 0 : index
    %95 = vector.load %arg2[%94, %c0_31, %c0_32] : memref<8x8x1xf32, #tpu.memory_space<vmem>>, vector<1x8x1xf32>
    %96 = vector.shape_cast %95 : vector<1x8x1xf32> to vector<8x1xf32>
    %97 = vector.broadcast %96 : vector<8x1xf32> to vector<8x32xf32>
    %98 = arith.mulf %97, %82 : vector<8x32xf32>
    %cst_33 = arith.constant 1.000000e+00 : f32
    %99 = vector.broadcast %cst_33 : f32 to vector<8x32xf32>
    %100 = arith.subf %99, %98 : vector<8x32xf32>
    %101 = arith.mulf %100, %49 : vector<8x32xf32>
    %102 = arith.mulf %98, %93 : vector<8x32xf32>
    %103 = arith.addf %101, %102 : vector<8x32xf32>
    %104 = arith.addi %0, %c1_i32 : i32
    %105 = vector.broadcast %104 : i32 to vector<8x1xi32>
    %106 = arith.cmpi sgt, %4, %105 : vector<8x1xi32>
    %107 = arith.extui %106 : vector<8x1xi1> to vector<8x1xi32>
    %108 = arith.sitofp %107 : vector<8x1xi32> to vector<8x1xf32>
    %109 = vector.broadcast %108 : vector<8x1xf32> to vector<8x32xf32>
    %110 = arith.mulf %103, %109 : vector<8x32xf32>
    %111 = arith.index_cast %c1_i32 : i32 to index
    %c0_34 = arith.constant 0 : index
    %c0_35 = arith.constant 0 : index
    %112 = vector.load %arg5[%111, %c0_34, %c0_35] : memref<8x8x32xf32, #tpu.memory_space<vmem>>, vector<1x8x32xf32>
    %113 = vector.shape_cast %112 : vector<1x8x32xf32> to vector<8x32xf32>
    %114 = vector.shape_cast %110 : vector<8x32xf32> to vector<1x8x32xf32>
    tpu.vector_store %arg5[%111, %c0_34, %c0_35], %114 {strides = array<i32>} : memref<8x8x32xf32, #tpu.memory_space<vmem>>, vector<1x8x32xf32>,
    %c2_i32 = arith.constant 2 : i32
    %cst_36 = arith.constant dense<0.000000e+00> : vector<8x96xf32>
    %115 = tpu.matmul %103, %5, %cst_36 {dimension_numbers = #tpu.dot_dimension_numbers<[1], [0], [0], [1], [0, 0, 1, 1], [], []>} : vector<8x32xf32>, vector<32x96xf32>, vector<8x96xf32> -> vector<8x96xf32>
    %116 = vector.extract_strided_slice %115 {offsets = [0, 0], sizes = [8, 32], strides = [1, 1]} : vector<8x96xf32> to vector<8x32xf32>
    %117 = vector.extract_strided_slice %115 {offsets = [0, 32], sizes = [8, 32], strides = [1, 1]} : vector<8x96xf32> to vector<8x32xf32>
    %118 = vector.extract_strided_slice %115 {offsets = [0, 64], sizes = [8, 32], strides = [1, 1]} : vector<8x96xf32> to vector<8x32xf32>
    %119 = arith.index_cast %c2_i32 : i32 to index
    %c0_37 = arith.constant 0 : index
    %c0_38 = arith.constant 0 : index
    %c0_39 = arith.constant 0 : index
    %120 = vector.load %arg1[%119, %c0_37, %c0_38, %c0_39] : memref<8x3x8x32xbf16, #tpu.memory_space<vmem>>, vector<1x3x8x32xbf16>
    %121 = vector.shape_cast %120 : vector<1x3x8x32xbf16> to vector<3x8x32xbf16>
    %122 = arith.extf %121 : vector<3x8x32xbf16> to vector<3x8x32xf32>
    %123 = vector.extract_strided_slice %122 {offsets = [0, 0, 0], sizes = [1, 8, 32], strides = [1, 1, 1]} : vector<3x8x32xf32> to vector<1x8x32xf32>
    %124 = vector.shape_cast %123 : vector<1x8x32xf32> to vector<8x32xf32>
    %125 = vector.extract_strided_slice %122 {offsets = [1, 0, 0], sizes = [1, 8, 32], strides = [1, 1, 1]} : vector<3x8x32xf32> to vector<1x8x32xf32>
    %126 = vector.shape_cast %125 : vector<1x8x32xf32> to vector<8x32xf32>
    %127 = vector.extract_strided_slice %122 {offsets = [2, 0, 0], sizes = [1, 8, 32], strides = [1, 1, 1]} : vector<3x8x32xf32> to vector<1x8x32xf32>
    %128 = vector.shape_cast %127 : vector<1x8x32xf32> to vector<8x32xf32>
    %129 = arith.addf %124, %116 : vector<8x32xf32>
    %cst_40 = arith.constant 5.000000e-01 : f32
    %130 = vector.broadcast %cst_40 : f32 to vector<8x32xf32>
    %131 = arith.mulf %130, %129 : vector<8x32xf32>
    %132 = math.tanh %131 : vector<8x32xf32>
    %cst_41 = arith.constant 1.000000e+00 : f32
    %133 = vector.broadcast %cst_41 : f32 to vector<8x32xf32>
    %134 = arith.addf %132, %133 : vector<8x32xf32>
    %cst_42 = arith.constant 5.000000e-01 : f32
    %135 = vector.broadcast %cst_42 : f32 to vector<8x32xf32>
    %136 = arith.mulf %135, %134 : vector<8x32xf32>
    %137 = arith.addf %126, %117 : vector<8x32xf32>
    %cst_43 = arith.constant 5.000000e-01 : f32
    %138 = vector.broadcast %cst_43 : f32 to vector<8x32xf32>
    %139 = arith.mulf %138, %137 : vector<8x32xf32>
    %140 = math.tanh %139 : vector<8x32xf32>
    %cst_44 = arith.constant 1.000000e+00 : f32
    %141 = vector.broadcast %cst_44 : f32 to vector<8x32xf32>
    %142 = arith.addf %140, %141 : vector<8x32xf32>
    %cst_45 = arith.constant 5.000000e-01 : f32
    %143 = vector.broadcast %cst_45 : f32 to vector<8x32xf32>
    %144 = arith.mulf %143, %142 : vector<8x32xf32>
    %145 = arith.mulf %118, %144 : vector<8x32xf32>
    %146 = arith.addf %128, %145 : vector<8x32xf32>
    %147 = math.tanh %146 : vector<8x32xf32>
    %148 = arith.index_cast %c2_i32 : i32 to index
    %c0_46 = arith.constant 0 : index
    %c0_47 = arith.constant 0 : index
    %149 = vector.load %arg2[%148, %c0_46, %c0_47] : memref<8x8x1xf32, #tpu.memory_space<vmem>>, vector<1x8x1xf32>
    %150 = vector.shape_cast %149 : vector<1x8x1xf32> to vector<8x1xf32>
    %151 = vector.broadcast %150 : vector<8x1xf32> to vector<8x32xf32>
    %152 = arith.mulf %151, %136 : vector<8x32xf32>
    %cst_48 = arith.constant 1.000000e+00 : f32
    %153 = vector.broadcast %cst_48 : f32 to vector<8x32xf32>
    %154 = arith.subf %153, %152 : vector<8x32xf32>
    %155 = arith.mulf %154, %103 : vector<8x32xf32>
    %156 = arith.mulf %152, %147 : vector<8x32xf32>
    %157 = arith.addf %155, %156 : vector<8x32xf32>
    %158 = arith.addi %0, %c2_i32 : i32
    %159 = vector.broadcast %158 : i32 to vector<8x1xi32>
    %160 = arith.cmpi sgt, %4, %159 : vector<8x1xi32>
    %161 = arith.extui %160 : vector<8x1xi1> to vector<8x1xi32>
    %162 = arith.sitofp %161 : vector<8x1xi32> to vector<8x1xf32>
    %163 = vector.broadcast %162 : vector<8x1xf32> to vector<8x32xf32>
    %164 = arith.mulf %157, %163 : vector<8x32xf32>
    %165 = arith.index_cast %c2_i32 : i32 to index
    %c0_49 = arith.constant 0 : index
    %c0_50 = arith.constant 0 : index
    %166 = vector.load %arg5[%165, %c0_49, %c0_50] : memref<8x8x32xf32, #tpu.memory_space<vmem>>, vector<1x8x32xf32>
    %167 = vector.shape_cast %166 : vector<1x8x32xf32> to vector<8x32xf32>
    %168 = vector.shape_cast %164 : vector<8x32xf32> to vector<1x8x32xf32>
    tpu.vector_store %arg5[%165, %c0_49, %c0_50], %168 {strides = array<i32>} : memref<8x8x32xf32, #tpu.memory_space<vmem>>, vector<1x8x32xf32>,
    %c3_i32 = arith.constant 3 : i32
    %cst_51 = arith.constant dense<0.000000e+00> : vector<8x96xf32>
    %169 = tpu.matmul %157, %5, %cst_51 {dimension_numbers = #tpu.dot_dimension_numbers<[1], [0], [0], [1], [0, 0, 1, 1], [], []>} : vector<8x32xf32>, vector<32x96xf32>, vector<8x96xf32> -> vector<8x96xf32>
    %170 = vector.extract_strided_slice %169 {offsets = [0, 0], sizes = [8, 32], strides = [1, 1]} : vector<8x96xf32> to vector<8x32xf32>
    %171 = vector.extract_strided_slice %169 {offsets = [0, 32], sizes = [8, 32], strides = [1, 1]} : vector<8x96xf32> to vector<8x32xf32>
    %172 = vector.extract_strided_slice %169 {offsets = [0, 64], sizes = [8, 32], strides = [1, 1]} : vector<8x96xf32> to vector<8x32xf32>
    %173 = arith.index_cast %c3_i32 : i32 to index
    %c0_52 = arith.constant 0 : index
    %c0_53 = arith.constant 0 : index
    %c0_54 = arith.constant 0 : index
    %174 = vector.load %arg1[%173, %c0_52, %c0_53, %c0_54] : memref<8x3x8x32xbf16, #tpu.memory_space<vmem>>, vector<1x3x8x32xbf16>
    %175 = vector.shape_cast %174 : vector<1x3x8x32xbf16> to vector<3x8x32xbf16>
    %176 = arith.extf %175 : vector<3x8x32xbf16> to vector<3x8x32xf32>
    %177 = vector.extract_strided_slice %176 {offsets = [0, 0, 0], sizes = [1, 8, 32], strides = [1, 1, 1]} : vector<3x8x32xf32> to vector<1x8x32xf32>
    %178 = vector.shape_cast %177 : vector<1x8x32xf32> to vector<8x32xf32>
    %179 = vector.extract_strided_slice %176 {offsets = [1, 0, 0], sizes = [1, 8, 32], strides = [1, 1, 1]} : vector<3x8x32xf32> to vector<1x8x32xf32>
    %180 = vector.shape_cast %179 : vector<1x8x32xf32> to vector<8x32xf32>
    %181 = vector.extract_strided_slice %176 {offsets = [2, 0, 0], sizes = [1, 8, 32], strides = [1, 1, 1]} : vector<3x8x32xf32> to vector<1x8x32xf32>
    %182 = vector.shape_cast %181 : vector<1x8x32xf32> to vector<8x32xf32>
    %183 = arith.addf %178, %170 : vector<8x32xf32>
    %cst_55 = arith.constant 5.000000e-01 : f32
    %184 = vector.broadcast %cst_55 : f32 to vector<8x32xf32>
    %185 = arith.mulf %184, %183 : vector<8x32xf32>
    %186 = math.tanh %185 : vector<8x32xf32>
    %cst_56 = arith.constant 1.000000e+00 : f32
    %187 = vector.broadcast %cst_56 : f32 to vector<8x32xf32>
    %188 = arith.addf %186, %187 : vector<8x32xf32>
    %cst_57 = arith.constant 5.000000e-01 : f32
    %189 = vector.broadcast %cst_57 : f32 to vector<8x32xf32>
    %190 = arith.mulf %189, %188 : vector<8x32xf32>
    %191 = arith.addf %180, %171 : vector<8x32xf32>
    %cst_58 = arith.constant 5.000000e-01 : f32
    %192 = vector.broadcast %cst_58 : f32 to vector<8x32xf32>
    %193 = arith.mulf %192, %191 : vector<8x32xf32>
    %194 = math.tanh %193 : vector<8x32xf32>
    %cst_59 = arith.constant 1.000000e+00 : f32
    %195 = vector.broadcast %cst_59 : f32 to vector<8x32xf32>
    %196 = arith.addf %194, %195 : vector<8x32xf32>
    %cst_60 = arith.constant 5.000000e-01 : f32
    %197 = vector.broadcast %cst_60 : f32 to vector<8x32xf32>
    %198 = arith.mulf %197, %196 : vector<8x32xf32>
    %199 = arith.mulf %172, %198 : vector<8x32xf32>
    %200 = arith.addf %182, %199 : vector<8x32xf32>
    %201 = math.tanh %200 : vector<8x32xf32>
    %202 = arith.index_cast %c3_i32 : i32 to index
    %c0_61 = arith.constant 0 : index
    %c0_62 = arith.constant 0 : index
    %203 = vector.load %arg2[%202, %c0_61, %c0_62] : memref<8x8x1xf32, #tpu.memory_space<vmem>>, vector<1x8x1xf32>
    %204 = vector.shape_cast %203 : vector<1x8x1xf32> to vector<8x1xf32>
    %205 = vector.broadcast %204 : vector<8x1xf32> to vector<8x32xf32>
    %206 = arith.mulf %205, %190 : vector<8x32xf32>
    %cst_63 = arith.constant 1.000000e+00 : f32
    %207 = vector.broadcast %cst_63 : f32 to vector<8x32xf32>
    %208 = arith.subf %207, %206 : vector<8x32xf32>
    %209 = arith.mulf %208, %157 : vector<8x32xf32>
    %210 = arith.mulf %206, %201 : vector<8x32xf32>
    %211 = arith.addf %209, %210 : vector<8x32xf32>
    %212 = arith.addi %0, %c3_i32 : i32
    %213 = vector.broadcast %212 : i32 to vector<8x1xi32>
    %214 = arith.cmpi sgt, %4, %213 : vector<8x1xi32>
    %215 = arith.extui %214 : vector<8x1xi1> to vector<8x1xi32>
    %216 = arith.sitofp %215 : vector<8x1xi32> to vector<8x1xf32>
    %217 = vector.broadcast %216 : vector<8x1xf32> to vector<8x32xf32>
    %218 = arith.mulf %211, %217 : vector<8x32xf32>
    %219 = arith.index_cast %c3_i32 : i32 to index
    %c0_64 = arith.constant 0 : index
    %c0_65 = arith.constant 0 : index
    %220 = vector.load %arg5[%219, %c0_64, %c0_65] : memref<8x8x32xf32, #tpu.memory_space<vmem>>, vector<1x8x32xf32>
    %221 = vector.shape_cast %220 : vector<1x8x32xf32> to vector<8x32xf32>
    %222 = vector.shape_cast %218 : vector<8x32xf32> to vector<1x8x32xf32>
    tpu.vector_store %arg5[%219, %c0_64, %c0_65], %222 {strides = array<i32>} : memref<8x8x32xf32, #tpu.memory_space<vmem>>, vector<1x8x32xf32>,
    %c4_i32 = arith.constant 4 : i32
    %cst_66 = arith.constant dense<0.000000e+00> : vector<8x96xf32>
    %223 = tpu.matmul %211, %5, %cst_66 {dimension_numbers = #tpu.dot_dimension_numbers<[1], [0], [0], [1], [0, 0, 1, 1], [], []>} : vector<8x32xf32>, vector<32x96xf32>, vector<8x96xf32> -> vector<8x96xf32>
    %224 = vector.extract_strided_slice %223 {offsets = [0, 0], sizes = [8, 32], strides = [1, 1]} : vector<8x96xf32> to vector<8x32xf32>
    %225 = vector.extract_strided_slice %223 {offsets = [0, 32], sizes = [8, 32], strides = [1, 1]} : vector<8x96xf32> to vector<8x32xf32>
    %226 = vector.extract_strided_slice %223 {offsets = [0, 64], sizes = [8, 32], strides = [1, 1]} : vector<8x96xf32> to vector<8x32xf32>
    %227 = arith.index_cast %c4_i32 : i32 to index
    %c0_67 = arith.constant 0 : index
    %c0_68 = arith.constant 0 : index
    %c0_69 = arith.constant 0 : index
    %228 = vector.load %arg1[%227, %c0_67, %c0_68, %c0_69] : memref<8x3x8x32xbf16, #tpu.memory_space<vmem>>, vector<1x3x8x32xbf16>
    %229 = vector.shape_cast %228 : vector<1x3x8x32xbf16> to vector<3x8x32xbf16>
    %230 = arith.extf %229 : vector<3x8x32xbf16> to vector<3x8x32xf32>
    %231 = vector.extract_strided_slice %230 {offsets = [0, 0, 0], sizes = [1, 8, 32], strides = [1, 1, 1]} : vector<3x8x32xf32> to vector<1x8x32xf32>
    %232 = vector.shape_cast %231 : vector<1x8x32xf32> to vector<8x32xf32>
    %233 = vector.extract_strided_slice %230 {offsets = [1, 0, 0], sizes = [1, 8, 32], strides = [1, 1, 1]} : vector<3x8x32xf32> to vector<1x8x32xf32>
    %234 = vector.shape_cast %233 : vector<1x8x32xf32> to vector<8x32xf32>
    %235 = vector.extract_strided_slice %230 {offsets = [2, 0, 0], sizes = [1, 8, 32], strides = [1, 1, 1]} : vector<3x8x32xf32> to vector<1x8x32xf32>
    %236 = vector.shape_cast %235 : vector<1x8x32xf32> to vector<8x32xf32>
    %237 = arith.addf %232, %224 : vector<8x32xf32>
    %cst_70 = arith.constant 5.000000e-01 : f32
    %238 = vector.broadcast %cst_70 : f32 to vector<8x32xf32>
    %239 = arith.mulf %238, %237 : vector<8x32xf32>
    %240 = math.tanh %239 : vector<8x32xf32>
    %cst_71 = arith.constant 1.000000e+00 : f32
    %241 = vector.broadcast %cst_71 : f32 to vector<8x32xf32>
    %242 = arith.addf %240, %241 : vector<8x32xf32>
    %cst_72 = arith.constant 5.000000e-01 : f32
    %243 = vector.broadcast %cst_72 : f32 to vector<8x32xf32>
    %244 = arith.mulf %243, %242 : vector<8x32xf32>
    %245 = arith.addf %234, %225 : vector<8x32xf32>
    %cst_73 = arith.constant 5.000000e-01 : f32
    %246 = vector.broadcast %cst_73 : f32 to vector<8x32xf32>
    %247 = arith.mulf %246, %245 : vector<8x32xf32>
    %248 = math.tanh %247 : vector<8x32xf32>
    %cst_74 = arith.constant 1.000000e+00 : f32
    %249 = vector.broadcast %cst_74 : f32 to vector<8x32xf32>
    %250 = arith.addf %248, %249 : vector<8x32xf32>
    %cst_75 = arith.constant 5.000000e-01 : f32
    %251 = vector.broadcast %cst_75 : f32 to vector<8x32xf32>
    %252 = arith.mulf %251, %250 : vector<8x32xf32>
    %253 = arith.mulf %226, %252 : vector<8x32xf32>
    %254 = arith.addf %236, %253 : vector<8x32xf32>
    %255 = math.tanh %254 : vector<8x32xf32>
    %256 = arith.index_cast %c4_i32 : i32 to index
    %c0_76 = arith.constant 0 : index
    %c0_77 = arith.constant 0 : index
    %257 = vector.load %arg2[%256, %c0_76, %c0_77] : memref<8x8x1xf32, #tpu.memory_space<vmem>>, vector<1x8x1xf32>
    %258 = vector.shape_cast %257 : vector<1x8x1xf32> to vector<8x1xf32>
    %259 = vector.broadcast %258 : vector<8x1xf32> to vector<8x32xf32>
    %260 = arith.mulf %259, %244 : vector<8x32xf32>
    %cst_78 = arith.constant 1.000000e+00 : f32
    %261 = vector.broadcast %cst_78 : f32 to vector<8x32xf32>
    %262 = arith.subf %261, %260 : vector<8x32xf32>
    %263 = arith.mulf %262, %211 : vector<8x32xf32>
    %264 = arith.mulf %260, %255 : vector<8x32xf32>
    %265 = arith.addf %263, %264 : vector<8x32xf32>
    %266 = arith.addi %0, %c4_i32 : i32
    %267 = vector.broadcast %266 : i32 to vector<8x1xi32>
    %268 = arith.cmpi sgt, %4, %267 : vector<8x1xi32>
    %269 = arith.extui %268 : vector<8x1xi1> to vector<8x1xi32>
    %270 = arith.sitofp %269 : vector<8x1xi32> to vector<8x1xf32>
    %271 = vector.broadcast %270 : vector<8x1xf32> to vector<8x32xf32>
    %272 = arith.mulf %265, %271 : vector<8x32xf32>
    %273 = arith.index_cast %c4_i32 : i32 to index
    %c0_79 = arith.constant 0 : index
    %c0_80 = arith.constant 0 : index
    %274 = vector.load %arg5[%273, %c0_79, %c0_80] : memref<8x8x32xf32, #tpu.memory_space<vmem>>, vector<1x8x32xf32>
    %275 = vector.shape_cast %274 : vector<1x8x32xf32> to vector<8x32xf32>
    %276 = vector.shape_cast %272 : vector<8x32xf32> to vector<1x8x32xf32>
    tpu.vector_store %arg5[%273, %c0_79, %c0_80], %276 {strides = array<i32>} : memref<8x8x32xf32, #tpu.memory_space<vmem>>, vector<1x8x32xf32>,
    %c5_i32 = arith.constant 5 : i32
    %cst_81 = arith.constant dense<0.000000e+00> : vector<8x96xf32>
    %277 = tpu.matmul %265, %5, %cst_81 {dimension_numbers = #tpu.dot_dimension_numbers<[1], [0], [0], [1], [0, 0, 1, 1], [], []>} : vector<8x32xf32>, vector<32x96xf32>, vector<8x96xf32> -> vector<8x96xf32>
    %278 = vector.extract_strided_slice %277 {offsets = [0, 0], sizes = [8, 32], strides = [1, 1]} : vector<8x96xf32> to vector<8x32xf32>
    %279 = vector.extract_strided_slice %277 {offsets = [0, 32], sizes = [8, 32], strides = [1, 1]} : vector<8x96xf32> to vector<8x32xf32>
    %280 = vector.extract_strided_slice %277 {offsets = [0, 64], sizes = [8, 32], strides = [1, 1]} : vector<8x96xf32> to vector<8x32xf32>
    %281 = arith.index_cast %c5_i32 : i32 to index
    %c0_82 = arith.constant 0 : index
    %c0_83 = arith.constant 0 : index
    %c0_84 = arith.constant 0 : index
    %282 = vector.load %arg1[%281, %c0_82, %c0_83, %c0_84] : memref<8x3x8x32xbf16, #tpu.memory_space<vmem>>, vector<1x3x8x32xbf16>
    %283 = vector.shape_cast %282 : vector<1x3x8x32xbf16> to vector<3x8x32xbf16>
    %284 = arith.extf %283 : vector<3x8x32xbf16> to vector<3x8x32xf32>
    %285 = vector.extract_strided_slice %284 {offsets = [0, 0, 0], sizes = [1, 8, 32], strides = [1, 1, 1]} : vector<3x8x32xf32> to vector<1x8x32xf32>
    %286 = vector.shape_cast %285 : vector<1x8x32xf32> to vector<8x32xf32>
    %287 = vector.extract_strided_slice %284 {offsets = [1, 0, 0], sizes = [1, 8, 32], strides = [1, 1, 1]} : vector<3x8x32xf32> to vector<1x8x32xf32>
    %288 = vector.shape_cast %287 : vector<1x8x32xf32> to vector<8x32xf32>
    %289 = vector.extract_strided_slice %284 {offsets = [2, 0, 0], sizes = [1, 8, 32], strides = [1, 1, 1]} : vector<3x8x32xf32> to vector<1x8x32xf32>
    %290 = vector.shape_cast %289 : vector<1x8x32xf32> to vector<8x32xf32>
    %291 = arith.addf %286, %278 : vector<8x32xf32>
    %cst_85 = arith.constant 5.000000e-01 : f32
    %292 = vector.broadcast %cst_85 : f32 to vector<8x32xf32>
    %293 = arith.mulf %292, %291 : vector<8x32xf32>
    %294 = math.tanh %293 : vector<8x32xf32>
    %cst_86 = arith.constant 1.000000e+00 : f32
    %295 = vector.broadcast %cst_86 : f32 to vector<8x32xf32>
    %296 = arith.addf %294, %295 : vector<8x32xf32>
    %cst_87 = arith.constant 5.000000e-01 : f32
    %297 = vector.broadcast %cst_87 : f32 to vector<8x32xf32>
    %298 = arith.mulf %297, %296 : vector<8x32xf32>
    %299 = arith.addf %288, %279 : vector<8x32xf32>
    %cst_88 = arith.constant 5.000000e-01 : f32
    %300 = vector.broadcast %cst_88 : f32 to vector<8x32xf32>
    %301 = arith.mulf %300, %299 : vector<8x32xf32>
    %302 = math.tanh %301 : vector<8x32xf32>
    %cst_89 = arith.constant 1.000000e+00 : f32
    %303 = vector.broadcast %cst_89 : f32 to vector<8x32xf32>
    %304 = arith.addf %302, %303 : vector<8x32xf32>
    %cst_90 = arith.constant 5.000000e-01 : f32
    %305 = vector.broadcast %cst_90 : f32 to vector<8x32xf32>
    %306 = arith.mulf %305, %304 : vector<8x32xf32>
    %307 = arith.mulf %280, %306 : vector<8x32xf32>
    %308 = arith.addf %290, %307 : vector<8x32xf32>
    %309 = math.tanh %308 : vector<8x32xf32>
    %310 = arith.index_cast %c5_i32 : i32 to index
    %c0_91 = arith.constant 0 : index
    %c0_92 = arith.constant 0 : index
    %311 = vector.load %arg2[%310, %c0_91, %c0_92] : memref<8x8x1xf32, #tpu.memory_space<vmem>>, vector<1x8x1xf32>
    %312 = vector.shape_cast %311 : vector<1x8x1xf32> to vector<8x1xf32>
    %313 = vector.broadcast %312 : vector<8x1xf32> to vector<8x32xf32>
    %314 = arith.mulf %313, %298 : vector<8x32xf32>
    %cst_93 = arith.constant 1.000000e+00 : f32
    %315 = vector.broadcast %cst_93 : f32 to vector<8x32xf32>
    %316 = arith.subf %315, %314 : vector<8x32xf32>
    %317 = arith.mulf %316, %265 : vector<8x32xf32>
    %318 = arith.mulf %314, %309 : vector<8x32xf32>
    %319 = arith.addf %317, %318 : vector<8x32xf32>
    %320 = arith.addi %0, %c5_i32 : i32
    %321 = vector.broadcast %320 : i32 to vector<8x1xi32>
    %322 = arith.cmpi sgt, %4, %321 : vector<8x1xi32>
    %323 = arith.extui %322 : vector<8x1xi1> to vector<8x1xi32>
    %324 = arith.sitofp %323 : vector<8x1xi32> to vector<8x1xf32>
    %325 = vector.broadcast %324 : vector<8x1xf32> to vector<8x32xf32>
    %326 = arith.mulf %319, %325 : vector<8x32xf32>
    %327 = arith.index_cast %c5_i32 : i32 to index
    %c0_94 = arith.constant 0 : index
    %c0_95 = arith.constant 0 : index
    %328 = vector.load %arg5[%327, %c0_94, %c0_95] : memref<8x8x32xf32, #tpu.memory_space<vmem>>, vector<1x8x32xf32>
    %329 = vector.shape_cast %328 : vector<1x8x32xf32> to vector<8x32xf32>
    %330 = vector.shape_cast %326 : vector<8x32xf32> to vector<1x8x32xf32>
    tpu.vector_store %arg5[%327, %c0_94, %c0_95], %330 {strides = array<i32>} : memref<8x8x32xf32, #tpu.memory_space<vmem>>, vector<1x8x32xf32>,
    %c6_i32 = arith.constant 6 : i32
    %cst_96 = arith.constant dense<0.000000e+00> : vector<8x96xf32>
    %331 = tpu.matmul %319, %5, %cst_96 {dimension_numbers = #tpu.dot_dimension_numbers<[1], [0], [0], [1], [0, 0, 1, 1], [], []>} : vector<8x32xf32>, vector<32x96xf32>, vector<8x96xf32> -> vector<8x96xf32>
    %332 = vector.extract_strided_slice %331 {offsets = [0, 0], sizes = [8, 32], strides = [1, 1]} : vector<8x96xf32> to vector<8x32xf32>
    %333 = vector.extract_strided_slice %331 {offsets = [0, 32], sizes = [8, 32], strides = [1, 1]} : vector<8x96xf32> to vector<8x32xf32>
    %334 = vector.extract_strided_slice %331 {offsets = [0, 64], sizes = [8, 32], strides = [1, 1]} : vector<8x96xf32> to vector<8x32xf32>
    %335 = arith.index_cast %c6_i32 : i32 to index
    %c0_97 = arith.constant 0 : index
    %c0_98 = arith.constant 0 : index
    %c0_99 = arith.constant 0 : index
    %336 = vector.load %arg1[%335, %c0_97, %c0_98, %c0_99] : memref<8x3x8x32xbf16, #tpu.memory_space<vmem>>, vector<1x3x8x32xbf16>
    %337 = vector.shape_cast %336 : vector<1x3x8x32xbf16> to vector<3x8x32xbf16>
    %338 = arith.extf %337 : vector<3x8x32xbf16> to vector<3x8x32xf32>
    %339 = vector.extract_strided_slice %338 {offsets = [0, 0, 0], sizes = [1, 8, 32], strides = [1, 1, 1]} : vector<3x8x32xf32> to vector<1x8x32xf32>
    %340 = vector.shape_cast %339 : vector<1x8x32xf32> to vector<8x32xf32>
    %341 = vector.extract_strided_slice %338 {offsets = [1, 0, 0], sizes = [1, 8, 32], strides = [1, 1, 1]} : vector<3x8x32xf32> to vector<1x8x32xf32>
    %342 = vector.shape_cast %341 : vector<1x8x32xf32> to vector<8x32xf32>
    %343 = vector.extract_strided_slice %338 {offsets = [2, 0, 0], sizes = [1, 8, 32], strides = [1, 1, 1]} : vector<3x8x32xf32> to vector<1x8x32xf32>
    %344 = vector.shape_cast %343 : vector<1x8x32xf32> to vector<8x32xf32>
    %345 = arith.addf %340, %332 : vector<8x32xf32>
    %cst_100 = arith.constant 5.000000e-01 : f32
    %346 = vector.broadcast %cst_100 : f32 to vector<8x32xf32>
    %347 = arith.mulf %346, %345 : vector<8x32xf32>
    %348 = math.tanh %347 : vector<8x32xf32>
    %cst_101 = arith.constant 1.000000e+00 : f32
    %349 = vector.broadcast %cst_101 : f32 to vector<8x32xf32>
    %350 = arith.addf %348, %349 : vector<8x32xf32>
    %cst_102 = arith.constant 5.000000e-01 : f32
    %351 = vector.broadcast %cst_102 : f32 to vector<8x32xf32>
    %352 = arith.mulf %351, %350 : vector<8x32xf32>
    %353 = arith.addf %342, %333 : vector<8x32xf32>
    %cst_103 = arith.constant 5.000000e-01 : f32
    %354 = vector.broadcast %cst_103 : f32 to vector<8x32xf32>
    %355 = arith.mulf %354, %353 : vector<8x32xf32>
    %356 = math.tanh %355 : vector<8x32xf32>
    %cst_104 = arith.constant 1.000000e+00 : f32
    %357 = vector.broadcast %cst_104 : f32 to vector<8x32xf32>
    %358 = arith.addf %356, %357 : vector<8x32xf32>
    %cst_105 = arith.constant 5.000000e-01 : f32
    %359 = vector.broadcast %cst_105 : f32 to vector<8x32xf32>
    %360 = arith.mulf %359, %358 : vector<8x32xf32>
    %361 = arith.mulf %334, %360 : vector<8x32xf32>
    %362 = arith.addf %344, %361 : vector<8x32xf32>
    %363 = math.tanh %362 : vector<8x32xf32>
    %364 = arith.index_cast %c6_i32 : i32 to index
    %c0_106 = arith.constant 0 : index
    %c0_107 = arith.constant 0 : index
    %365 = vector.load %arg2[%364, %c0_106, %c0_107] : memref<8x8x1xf32, #tpu.memory_space<vmem>>, vector<1x8x1xf32>
    %366 = vector.shape_cast %365 : vector<1x8x1xf32> to vector<8x1xf32>
    %367 = vector.broadcast %366 : vector<8x1xf32> to vector<8x32xf32>
    %368 = arith.mulf %367, %352 : vector<8x32xf32>
    %cst_108 = arith.constant 1.000000e+00 : f32
    %369 = vector.broadcast %cst_108 : f32 to vector<8x32xf32>
    %370 = arith.subf %369, %368 : vector<8x32xf32>
    %371 = arith.mulf %370, %319 : vector<8x32xf32>
    %372 = arith.mulf %368, %363 : vector<8x32xf32>
    %373 = arith.addf %371, %372 : vector<8x32xf32>
    %374 = arith.addi %0, %c6_i32 : i32
    %375 = vector.broadcast %374 : i32 to vector<8x1xi32>
    %376 = arith.cmpi sgt, %4, %375 : vector<8x1xi32>
    %377 = arith.extui %376 : vector<8x1xi1> to vector<8x1xi32>
    %378 = arith.sitofp %377 : vector<8x1xi32> to vector<8x1xf32>
    %379 = vector.broadcast %378 : vector<8x1xf32> to vector<8x32xf32>
    %380 = arith.mulf %373, %379 : vector<8x32xf32>
    %381 = arith.index_cast %c6_i32 : i32 to index
    %c0_109 = arith.constant 0 : index
    %c0_110 = arith.constant 0 : index
    %382 = vector.load %arg5[%381, %c0_109, %c0_110] : memref<8x8x32xf32, #tpu.memory_space<vmem>>, vector<1x8x32xf32>
    %383 = vector.shape_cast %382 : vector<1x8x32xf32> to vector<8x32xf32>
    %384 = vector.shape_cast %380 : vector<8x32xf32> to vector<1x8x32xf32>
    tpu.vector_store %arg5[%381, %c0_109, %c0_110], %384 {strides = array<i32>} : memref<8x8x32xf32, #tpu.memory_space<vmem>>, vector<1x8x32xf32>,
    %c7_i32 = arith.constant 7 : i32
    %cst_111 = arith.constant dense<0.000000e+00> : vector<8x96xf32>
    %385 = tpu.matmul %373, %5, %cst_111 {dimension_numbers = #tpu.dot_dimension_numbers<[1], [0], [0], [1], [0, 0, 1, 1], [], []>} : vector<8x32xf32>, vector<32x96xf32>, vector<8x96xf32> -> vector<8x96xf32>
    %386 = vector.extract_strided_slice %385 {offsets = [0, 0], sizes = [8, 32], strides = [1, 1]} : vector<8x96xf32> to vector<8x32xf32>
    %387 = vector.extract_strided_slice %385 {offsets = [0, 32], sizes = [8, 32], strides = [1, 1]} : vector<8x96xf32> to vector<8x32xf32>
    %388 = vector.extract_strided_slice %385 {offsets = [0, 64], sizes = [8, 32], strides = [1, 1]} : vector<8x96xf32> to vector<8x32xf32>
    %389 = arith.index_cast %c7_i32 : i32 to index
    %c0_112 = arith.constant 0 : index
    %c0_113 = arith.constant 0 : index
    %c0_114 = arith.constant 0 : index
    %390 = vector.load %arg1[%389, %c0_112, %c0_113, %c0_114] : memref<8x3x8x32xbf16, #tpu.memory_space<vmem>>, vector<1x3x8x32xbf16>
    %391 = vector.shape_cast %390 : vector<1x3x8x32xbf16> to vector<3x8x32xbf16>
    %392 = arith.extf %391 : vector<3x8x32xbf16> to vector<3x8x32xf32>
    %393 = vector.extract_strided_slice %392 {offsets = [0, 0, 0], sizes = [1, 8, 32], strides = [1, 1, 1]} : vector<3x8x32xf32> to vector<1x8x32xf32>
    %394 = vector.shape_cast %393 : vector<1x8x32xf32> to vector<8x32xf32>
    %395 = vector.extract_strided_slice %392 {offsets = [1, 0, 0], sizes = [1, 8, 32], strides = [1, 1, 1]} : vector<3x8x32xf32> to vector<1x8x32xf32>
    %396 = vector.shape_cast %395 : vector<1x8x32xf32> to vector<8x32xf32>
    %397 = vector.extract_strided_slice %392 {offsets = [2, 0, 0], sizes = [1, 8, 32], strides = [1, 1, 1]} : vector<3x8x32xf32> to vector<1x8x32xf32>
    %398 = vector.shape_cast %397 : vector<1x8x32xf32> to vector<8x32xf32>
    %399 = arith.addf %394, %386 : vector<8x32xf32>
    %cst_115 = arith.constant 5.000000e-01 : f32
    %400 = vector.broadcast %cst_115 : f32 to vector<8x32xf32>
    %401 = arith.mulf %400, %399 : vector<8x32xf32>
    %402 = math.tanh %401 : vector<8x32xf32>
    %cst_116 = arith.constant 1.000000e+00 : f32
    %403 = vector.broadcast %cst_116 : f32 to vector<8x32xf32>
    %404 = arith.addf %402, %403 : vector<8x32xf32>
    %cst_117 = arith.constant 5.000000e-01 : f32
    %405 = vector.broadcast %cst_117 : f32 to vector<8x32xf32>
    %406 = arith.mulf %405, %404 : vector<8x32xf32>
    %407 = arith.addf %396, %387 : vector<8x32xf32>
    %cst_118 = arith.constant 5.000000e-01 : f32
    %408 = vector.broadcast %cst_118 : f32 to vector<8x32xf32>
    %409 = arith.mulf %408, %407 : vector<8x32xf32>
    %410 = math.tanh %409 : vector<8x32xf32>
    %cst_119 = arith.constant 1.000000e+00 : f32
    %411 = vector.broadcast %cst_119 : f32 to vector<8x32xf32>
    %412 = arith.addf %410, %411 : vector<8x32xf32>
    %cst_120 = arith.constant 5.000000e-01 : f32
    %413 = vector.broadcast %cst_120 : f32 to vector<8x32xf32>
    %414 = arith.mulf %413, %412 : vector<8x32xf32>
    %415 = arith.mulf %388, %414 : vector<8x32xf32>
    %416 = arith.addf %398, %415 : vector<8x32xf32>
    %417 = math.tanh %416 : vector<8x32xf32>
    %418 = arith.index_cast %c7_i32 : i32 to index
    %c0_121 = arith.constant 0 : index
    %c0_122 = arith.constant 0 : index
    %419 = vector.load %arg2[%418, %c0_121, %c0_122] : memref<8x8x1xf32, #tpu.memory_space<vmem>>, vector<1x8x1xf32>
    %420 = vector.shape_cast %419 : vector<1x8x1xf32> to vector<8x1xf32>
    %421 = vector.broadcast %420 : vector<8x1xf32> to vector<8x32xf32>
    %422 = arith.mulf %421, %406 : vector<8x32xf32>
    %cst_123 = arith.constant 1.000000e+00 : f32
    %423 = vector.broadcast %cst_123 : f32 to vector<8x32xf32>
    %424 = arith.subf %423, %422 : vector<8x32xf32>
    %425 = arith.mulf %424, %373 : vector<8x32xf32>
    %426 = arith.mulf %422, %417 : vector<8x32xf32>
    %427 = arith.addf %425, %426 : vector<8x32xf32>
    %428 = arith.addi %0, %c7_i32 : i32
    %429 = vector.broadcast %428 : i32 to vector<8x1xi32>
    %430 = arith.cmpi sgt, %4, %429 : vector<8x1xi32>
    %431 = arith.extui %430 : vector<8x1xi1> to vector<8x1xi32>
    %432 = arith.sitofp %431 : vector<8x1xi32> to vector<8x1xf32>
    %433 = vector.broadcast %432 : vector<8x1xf32> to vector<8x32xf32>
    %434 = arith.mulf %427, %433 : vector<8x32xf32>
    %435 = arith.index_cast %c7_i32 : i32 to index
    %c0_124 = arith.constant 0 : index
    %c0_125 = arith.constant 0 : index
    %436 = vector.load %arg5[%435, %c0_124, %c0_125] : memref<8x8x32xf32, #tpu.memory_space<vmem>>, vector<1x8x32xf32>
    %437 = vector.shape_cast %436 : vector<1x8x32xf32> to vector<8x32xf32>
    %438 = vector.shape_cast %434 : vector<8x32xf32> to vector<1x8x32xf32>
    tpu.vector_store %arg5[%435, %c0_124, %c0_125], %438 {strides = array<i32>} : memref<8x8x32xf32, #tpu.memory_space<vmem>>, vector<1x8x32xf32>,
    %c8_i32_126 = arith.constant 8 : i32
    %c0_127 = arith.constant 0 : index
    %c0_128 = arith.constant 0 : index
    %439 = vector.load %arg6[%c0_127, %c0_128] : memref<8x32xf32, #tpu.memory_space<vmem>>, vector<8x32xf32>
    tpu.vector_store %arg6[%c0_127, %c0_128], %427 {strides = array<i32>} : memref<8x32xf32, #tpu.memory_space<vmem>>, vector<8x32xf32>,
    return
  }
  func.func @transform_0(%arg0: i32) -> (i32, i32, i32, i32) {
    %c0_i32 = arith.constant 0 : i32
    %c0_i32_0 = arith.constant 0 : i32
    %c0_i32_1 = arith.constant 0 : i32
    %c0_i32_2 = arith.constant 0 : i32
    return %arg0, %c0_i32, %c0_i32_0, %c0_i32_1 : i32, i32, i32, i32
  }
  func.func @transform_1(%arg0: i32) -> (i32, i32, i32) {
    %c0_i32 = arith.constant 0 : i32
    %c0_i32_0 = arith.constant 0 : i32
    %c0_i32_1 = arith.constant 0 : i32
    return %arg0, %c0_i32, %c0_i32_0 : i32, i32, i32
  }
  func.func @transform_2(%arg0: i32) -> (i32, i32) {
    %c0_i32 = arith.constant 0 : i32
    %c0_i32_0 = arith.constant 0 : i32
    %c0_i32_1 = arith.constant 0 : i32
    return %c0_i32, %c0_i32_0 : i32, i32
  }
  func.func @transform_3(%arg0: i32) -> (i32, i32) {
    %c0_i32 = arith.constant 0 : i32
    %c0_i32_0 = arith.constant 0 : i32
    %c0_i32_1 = arith.constant 0 : i32
    return %c0_i32, %c0_i32_0 : i32, i32
  }
  func.func @transform_4(%arg0: i32) -> (i32, i32, i32) {
    %c0_i32 = arith.constant 0 : i32
    %c0_i32_0 = arith.constant 0 : i32
    %c0_i32_1 = arith.constant 0 : i32
    return %arg0, %c0_i32, %c0_i32_0 : i32, i32, i32
  }
}

</mosaic_0001>

<llo_original>
// kernel: tpu_custom_call.1
$region0: #{tpu_custom_call.1}
  #allocation0 [shape = 'u32[]', space=smem, size = 0x4, offset = 0x4, fixed_abs, tag = 'smem constant byte address 0x4 - core index']
  #allocation1 [shape = 'u32[144,128]{1,0:T(1,128)}', space=vmem, size = 0x12000, scoped, tag = 'internal scratch']
  #allocation2 [shape = 'f32[8,32]{1,0:T(8,128)}', space=vmem, size = 0x1000, scoped, tag = 'scratch operand']
  %s0 = inlined_call_operand.hbm [shape: bf16[8,3,8,32], index: 0, kind: input, shape index: {}]
  %s1 = inlined_call_operand.vmem [shape: f32[8,8,1], index: 1, kind: input, shape index: {}]
  %s2 = inlined_call_operand.vmem [shape: s32[8,1], index: 2, kind: input, shape index: {}]
  %s3 = inlined_call_operand.vmem [shape: f32[32,96], index: 3, kind: input, shape index: {}]
  %s4 = inlined_call_operand.hbm [shape: f32[8,8,32], index: 4, kind: output, shape index: {}]
  %s5 = sld [smem:[#allocation0]]
  $region34: #{tpu_custom_call.1} parent=0
    _
  %s7 = ssub.s32 1, %s5
  %s8 = scalar_select 0, %s7, %s5
  $region1: #{tpu_custom_call.1} parent=0
    #allocation3 [shape = 'u8[49152]{0}', space=vmem, size = 0xc000, scoped, tag = 'input window, operand 0, single buffered']
    #allocation4 [shape = 's32[1]{0}', space=sflag, size = 0x4, scoped, tag = 'scoped memory for tpu_custom_call.1']
    #allocation5 [shape = 's32[1]{0}', space=sflag, size = 0x4, scoped, tag = 'scoped memory for tpu_custom_call.1']
    #allocation6 [shape = 'u8[32768]{0}', space=vmem, size = 0x8000, scoped, tag = 'output window, operand 0, single buffered']
    %9 = vsyncpa [#allocation4], 0
    %10 = vsyncpa [#allocation5], 0
    // Predicated region
    $region2: #{tpu_custom_call.1} parent=1 // pred_check
      _
    $region3: #{tpu_custom_call.1} parent=1 // pred_check_branch
      %12 = sbr.rel (0) target = $region5
    $region4: #{tpu_custom_call.1} parent=1 // pred_region
      %s14 = ssub.s32 1536, 1536
      %15 = vsyncadd [#allocation4], %s14
      %s16 = sshll.u32 [#allocation3], 4
      %s17 = int_to_ptr.vmem [resolvable:$true] %s16
      %22 = dma.hbm_to_vmem [thread:$0]  %s0, 1536, %s17, [#allocation4], 64, 64, 4
    $region5: #{tpu_custom_call.1} parent=1 // pred_fallthru
      _
    // Predicated region
    $region6: #{tpu_custom_call.1} parent=1 // pred_check
      _
    $region7: #{tpu_custom_call.1} parent=1 // pred_check_branch
      %24 = sbr.rel (0) target = $region9
    $region8: #{tpu_custom_call.1} parent=1 // pred_region
      _
    $region9: #{tpu_custom_call.1} parent=1 // pred_fallthru
      _
    // Predicated region
    $region10: #{tpu_custom_call.1} parent=1 // pred_check
      _
    $region11: #{tpu_custom_call.1} parent=1 // pred_check_branch
      %26 = sbr.rel (0) target = $region13
    $region12: #{tpu_custom_call.1} parent=1 // pred_region
      _
    $region13: #{tpu_custom_call.1} parent=1 // pred_fallthru
      _
    // Predicated region
    $region14: #{tpu_custom_call.1} parent=1 // pred_check
      _
    $region15: #{tpu_custom_call.1} parent=1 // pred_check_branch
      %28 = sbr.rel (0) target = $region17
    $region16: #{tpu_custom_call.1} parent=1 // pred_region
      _
    $region17: #{tpu_custom_call.1} parent=1 // pred_fallthru
      _
    // Predicated region
    $region18: #{tpu_custom_call.1} parent=1 // pred_check
      _
    $region19: #{tpu_custom_call.1} parent=1 // pred_check_branch
      %30 = sbr.rel (0) target = $region21
    $region20: #{tpu_custom_call.1} parent=1 // pred_region
      %31 = dma.done [#allocation4], 1536
    $region21: #{tpu_custom_call.1} parent=1 // pred_fallthru
      _
    %s32 = smul.u32 0, 8
    %p33 = scmp.eq.s32.totalorder 0, 0
    // Predicated region
    $region22: #{tpu_custom_call.1} parent=1 // pred_check
      %p34 = pneg %p33
    $region23: #{tpu_custom_call.1} parent=1 // pred_check_branch
      %36 = sbr.rel (%p34) target = $region25
    $region24: #{tpu_custom_call.1} parent=1 // pred_region
      %vm37 = vcmask 261120
      %38 = vst.msk [vmem:[#allocation2] sm:$0xff] %vm37, 0.0
    $region25: #{tpu_custom_call.1} parent=1 // pred_fallthru
      _
    %v39 = vld [vmem:[%s2] sm:$0xff]
    %v40 = vld [vmem:[%s3] sm:$0xff]
    %v41 = vld [vmem:[%s3 + $0x8] sm:$0xff]
    %v42 = vld [vmem:[%s3 + $0x10] sm:$0xff]
    %v43 = vld [vmem:[%s3 + $0x18] sm:$0xff]
    %v44 = vld [vmem:[#allocation2] sm:$0xff]
    %vm45 = vcmask 261120
    %v47 = vsel %vm45, %v44, 0
    %49 = vmatprep.subr.mxu0 0.0
    %50 = vmatpush1.msra.mxu0 %v40
    %51 = vmatprep.subr.mxu0 0.0
    %52 = vmatpush1.msra.mxu0 %v41
    %53 = vmatprep.subr.mxu0 0.0
    %54 = vmatpush1.msra.mxu0 %v42
    %55 = vmatprep.subr.mxu0 0.0
    %56 = vmatpush1.msra.mxu0 %v43
    %57 = vmatprep.subr.mxu0 0.0
    %58 = vmatpush1.msra.mxu0 0.0
    %59 = vmatprep.subr.mxu0 0.0
    %60 = vmatpush1.msra.mxu0 0.0
    %61 = vmatprep.subr.mxu0 0.0
    %62 = vmatpush1.msra.mxu0 0.0
    %63 = vmatprep.subr.mxu0 0.0
    %64 = vmatpush1.msra.mxu0 0.0
    %65 = vmatprep.subr.mxu0 0.0
    %66 = vmatpush1.msra.mxu0 0.0
    %67 = vmatprep.subr.mxu0 0.0
    %68 = vmatpush1.msra.mxu0 0.0
    %69 = vmatprep.subr.mxu0 0.0
    %70 = vmatpush1.msra.mxu0 0.0
    %71 = vmatprep.subr.mxu0 0.0
    %72 = vmatpush1.msra.mxu0 0.0
    %73 = vmatprep.subr.mxu0 0.0
    %74 = vmatpush1.msra.mxu0 0.0
    %75 = vmatprep.subr.mxu0 0.0
    %76 = vmatpush1.msra.mxu0 0.0
    %77 = vmatprep.subr.mxu0 0.0
    %78 = vmatpush1.msra.mxu0 0.0
    %79 = vmatprep.subr.mxu0 0.0
    %80 = vmatpush1.msra.mxu0 0.0
    %81 = vmatprep.subr.mxu0 0.0
    %82 = vmatpush1.msra.mxu0 0.0
    %83 = vmatprep.subr.mxu0 0.0
    %84 = vmatpush1.msra.mxu0 0.0
    %85 = vmatprep.subr.mxu0 0.0
    %86 = vmatpush1.msra.mxu0 0.0
    %87 = vmatprep.subr.mxu0 0.0
    %88 = vmatpush1.msra.mxu0 0.0
    %89 = vmatprep.subr.mxu0 0.0
    %90 = vmatpush1.msra.mxu0 0.0
    %91 = vmatprep.subr.mxu0 0.0
    %92 = vmatpush1.msra.mxu0 0.0
    %93 = vmatprep.subr.mxu0 0.0
    %94 = vmatpush1.msra.mxu0 0.0
    %95 = vmatprep.subr.mxu0 0.0
    %96 = vmatpush1.msra.mxu0 0.0
    %97 = vmatprep.subr.mxu0 0.0
    %98 = vmatpush1.msra.mxu0 0.0
    %99 = vmatprep.subr.mxu0 0.0
    %100 = vmatpush1.msra.mxu0 0.0
    %101 = vmatprep.subr.mxu0 0.0
    %102 = vmatpush1.msra.mxu0 0.0
    %103 = vmatprep.subr.mxu0 0.0
    %104 = vmatpush1.msra.mxu0 0.0
    %105 = vmatprep.subr.mxu0 0.0
    %106 = vmatpush1.msra.mxu0 0.0
    %107 = vmatprep.subr.mxu0 0.0
    %108 = vmatpush1.msra.mxu0 0.0
    %109 = vmatprep.subr.mxu0 0.0
    %110 = vmatpush1.msra.mxu0 0.0
    %111 = vmatprep.subr.mxu0 0.0
    %112 = vmatpush1.msra.mxu0 0.0
    %113 = vmatprep.mubr.f32.mxu0 0.0
    %114 = vmatmul.mubr.f32.gmra.mrb[0].mxu0 %v47
    %v115 = vpop.f32.mrb[0].mxu0
    %v116 = vadd.f32 0.0, %v115
    %v117 = vpop.f32.mrb[0].mxu0
    %118 = vdwg.mxu0
    %v119 = vld [vmem:[#allocation3] sm:$0xf]
    %v120 = vld [vmem:[#allocation3 + $0x4] sm:$0xf]
    %v121 = vld [vmem:[#allocation3 + $0x8] sm:$0xf]
    %v122 = vunpack.c.l.bf16 %v119
    %v123 = vunpack.c.l.bf16 %v120
    %v124 = vunpack.c.l.bf16 %v121
    %v125 = vadd.f32 %v122, %v116
    %v126 = vmul.f32 %v125, 0.5
    %v127 = vtanh.pop %v126
    %v128 = vadd.f32 %v127, 1.0
    %v129 = vmul.f32 %v128, 0.5
    %131 = vrot.lane.b32.xlu0 %v116, 96
    %v132 = vpop.permute.xlu0 %131
    %v134 = vadd.f32 %v123, %v132
    %v135 = vmul.f32 %v134, 0.5
    %v136 = vtanh.pop %v135
    %v137 = vadd.f32 %v136, 1.0
    %v138 = vmul.f32 %v137, 0.5
    %140 = vrot.lane.b32.xlu0 %v138, 64
    %v141 = vpop.permute.xlu0 %140
    %v143 = vmul.f32 %v116, %v141
    %145 = vrot.lane.b32.xlu0 %v143, 64
    %v146 = vpop.permute.xlu0 %145
    %v148 = vadd.f32 %v124, %v146
    %v149 = vtanh.pop %v148
    %v150 = vld [vmem:[%s1] sm:$0xff]
    %152 = vset.pattern.permute.xlu0 0
    %153 = vperm.xlu0 %152, %v150
    %v154 = vpop.permute.xlu0 %153
    %v156 = vmul.f32 %v154, %v129
    %v157 = vsub.f32 1.0, %v156
    %v158 = vmul.f32 %v157, %v44
    %v159 = vmul.f32 %v156, %v149
    %v160 = vadd.f32 %v158, %v159
    %v161 = vstv %s32
    %vm162 = vcmp.gt.s32.totalorder %v39, %v161
    %v163 = vsel %vm162, 1, 0
    %v164 = vcvt.s32.f32 %v163
    %166 = vset.pattern.permute.xlu0 0
    %167 = vperm.xlu0 %166, %v164
    %v168 = vpop.permute.xlu0 %167
    %v170 = vmul.f32 %v160, %v168
    %171 = vst.msk [vmem:[#allocation6] sm:$0xff] %vm45, %v170
    %v173 = vsel %vm45, %v160, 0
    %175 = vmatprep.subr.mxu0 0.0
    %176 = vmatpush1.msra.mxu0 %v40
    %177 = vmatprep.subr.mxu0 0.0
    %178 = vmatpush1.msra.mxu0 %v41
    %179 = vmatprep.subr.mxu0 0.0
    %180 = vmatpush1.msra.mxu0 %v42
    %181 = vmatprep.subr.mxu0 0.0
    %182 = vmatpush1.msra.mxu0 %v43
    %183 = vmatprep.subr.mxu0 0.0
    %184 = vmatpush1.msra.mxu0 0.0
    %185 = vmatprep.subr.mxu0 0.0
    %186 = vmatpush1.msra.mxu0 0.0
    %187 = vmatprep.subr.mxu0 0.0
    %188 = vmatpush1.msra.mxu0 0.0
    %189 = vmatprep.subr.mxu0 0.0
    %190 = vmatpush1.msra.mxu0 0.0
    %191 = vmatprep.subr.mxu0 0.0
    %192 = vmatpush1.msra.mxu0 0.0
    %193 = vmatprep.subr.mxu0 0.0
    %194 = vmatpush1.msra.mxu0 0.0
    %195 = vmatprep.subr.mxu0 0.0
    %196 = vmatpush1.msra.mxu0 0.0
    %197 = vmatprep.subr.mxu0 0.0
    %198 = vmatpush1.msra.mxu0 0.0
    %199 = vmatprep.subr.mxu0 0.0
    %200 = vmatpush1.msra.mxu0 0.0
    %201 = vmatprep.subr.mxu0 0.0
    %202 = vmatpush1.msra.mxu0 0.0
    %203 = vmatprep.subr.mxu0 0.0
    %204 = vmatpush1.msra.mxu0 0.0
    %205 = vmatprep.subr.mxu0 0.0
    %206 = vmatpush1.msra.mxu0 0.0
    %207 = vmatprep.subr.mxu0 0.0
    %208 = vmatpush1.msra.mxu0 0.0
    %209 = vmatprep.subr.mxu0 0.0
    %210 = vmatpush1.msra.mxu0 0.0
    %211 = vmatprep.subr.mxu0 0.0
    %212 = vmatpush1.msra.mxu0 0.0
    %213 = vmatprep.subr.mxu0 0.0
    %214 = vmatpush1.msra.mxu0 0.0
    %215 = vmatprep.subr.mxu0 0.0
    %216 = vmatpush1.msra.mxu0 0.0
    %217 = vmatprep.subr.mxu0 0.0
    %218 = vmatpush1.msra.mxu0 0.0
    %219 = vmatprep.subr.mxu0 0.0
    %220 = vmatpush1.msra.mxu0 0.0
    %221 = vmatprep.subr.mxu0 0.0
    %222 = vmatpush1.msra.mxu0 0.0
    %223 = vmatprep.subr.mxu0 0.0
    %224 = vmatpush1.msra.mxu0 0.0
    %225 = vmatprep.subr.mxu0 0.0
    %226 = vmatpush1.msra.mxu0 0.0
    %227 = vmatprep.subr.mxu0 0.0
    %228 = vmatpush1.msra.mxu0 0.0
    %229 = vmatprep.subr.mxu0 0.0
    %230 = vmatpush1.msra.mxu0 0.0
    %231 = vmatprep.subr.mxu0 0.0
    %232 = vmatpush1.msra.mxu0 0.0
    %233 = vmatprep.subr.mxu0 0.0
    %234 = vmatpush1.msra.mxu0 0.0
    %235 = vmatprep.subr.mxu0 0.0
    %236 = vmatpush1.msra.mxu0 0.0
    %237 = vmatprep.subr.mxu0 0.0
    %238 = vmatpush1.msra.mxu0 0.0
    %239 = vmatprep.mubr.f32.mxu0 0.0
    %240 = vmatmul.mubr.f32.gmra.mrb[0].mxu0 %v173
    %v241 = vpop.f32.mrb[0].mxu0
    %v242 = vadd.f32 0.0, %v241
    %v243 = vpop.f32.mrb[0].mxu0
    %244 = vdwg.mxu0
    %s245 = scalar_lea.vmem [#allocation3], 12
    %v246 = vld [vmem:[%s245] sm:$0xf]
    %v247 = vld [vmem:[%s245 + $0x4] sm:$0xf]
    %v248 = vld [vmem:[%s245 + $0x8] sm:$0xf]
    %v249 = vunpack.c.l.bf16 %v246
    %v250 = vunpack.c.l.bf16 %v247
    %v251 = vunpack.c.l.bf16 %v248
    %v252 = vadd.f32 %v249, %v242
    %v253 = vmul.f32 %v252, 0.5
    %v254 = vtanh.pop %v253
    %v255 = vadd.f32 %v254, 1.0
    %v256 = vmul.f32 %v255, 0.5
    %258 = vrot.lane.b32.xlu0 %v242, 96
    %v259 = vpop.permute.xlu0 %258
    %v261 = vadd.f32 %v250, %v259
    %v262 = vmul.f32 %v261, 0.5
    %v263 = vtanh.pop %v262
    %v264 = vadd.f32 %v263, 1.0
    %v265 = vmul.f32 %v264, 0.5
    %267 = vrot.lane.b32.xlu0 %v265, 64
    %v268 = vpop.permute.xlu0 %267
    %v270 = vmul.f32 %v242, %v268
    %272 = vrot.lane.b32.xlu0 %v270, 64
    %v273 = vpop.permute.xlu0 %272
    %v275 = vadd.f32 %v251, %v273
    %v276 = vtanh.pop %v275
    %s277 = scalar_lea.vmem %s1, 8
    %v278 = vld [vmem:[%s277] sm:$0xff]
    %280 = vset.pattern.permute.xlu0 0
    %281 = vperm.xlu0 %280, %v278
    %v282 = vpop.permute.xlu0 %281
    %v284 = vmul.f32 %v282, %v256
    %v285 = vsub.f32 1.0, %v284
    %v286 = vmul.f32 %v285, %v160
    %v287 = vmul.f32 %v284, %v276
    %v288 = vadd.f32 %v286, %v287
    %s289 = sadd.s32 %s32, 1
    %v290 = vstv %s289
    %vm291 = vcmp.gt.s32.totalorder %v39, %v290
    %v292 = vsel %vm291, 1, 0
    %v293 = vcvt.s32.f32 %v292
    %295 = vset.pattern.permute.xlu0 0
    %296 = vperm.xlu0 %295, %v293
    %v297 = vpop.permute.xlu0 %296
    %v299 = vmul.f32 %v288, %v297
    %s300 = scalar_lea.vmem [#allocation6], 8
    %301 = vst.msk [vmem:[%s300] sm:$0xff] %vm45, %v299
    %v303 = vsel %vm45, %v288, 0
    %305 = vmatprep.subr.mxu0 0.0
    %306 = vmatpush1.msra.mxu0 %v40
    %307 = vmatprep.subr.mxu0 0.0
    %308 = vmatpush1.msra.mxu0 %v41
    %309 = vmatprep.subr.mxu0 0.0
    %310 = vmatpush1.msra.mxu0 %v42
    %311 = vmatprep.subr.mxu0 0.0
    %312 = vmatpush1.msra.mxu0 %v43
    %313 = vmatprep.subr.mxu0 0.0
    %314 = vmatpush1.msra.mxu0 0.0
    %315 = vmatprep.subr.mxu0 0.0
    %316 = vmatpush1.msra.mxu0 0.0
    %317 = vmatprep.subr.mxu0 0.0
    %318 = vmatpush1.msra.mxu0 0.0
    %319 = vmatprep.subr.mxu0 0.0
    %320 = vmatpush1.msra.mxu0 0.0
    %321 = vmatprep.subr.mxu0 0.0
    %322 = vmatpush1.msra.mxu0 0.0
    %323 = vmatprep.subr.mxu0 0.0
    %324 = vmatpush1.msra.mxu0 0.0
    %325 = vmatprep.subr.mxu0 0.0
    %326 = vmatpush1.msra.mxu0 0.0
    %327 = vmatprep.subr.mxu0 0.0
    %328 = vmatpush1.msra.mxu0 0.0
    %329 = vmatprep.subr.mxu0 0.0
    %330 = vmatpush1.msra.mxu0 0.0
    %331 = vmatprep.subr.mxu0 0.0
    %332 = vmatpush1.msra.mxu0 0.0
    %333 = vmatprep.subr.mxu0 0.0
    %334 = vmatpush1.msra.mxu0 0.0
    %335 = vmatprep.subr.mxu0 0.0
    %336 = vmatpush1.msra.mxu0 0.0
    %337 = vmatprep.subr.mxu0 0.0
    %338 = vmatpush1.msra.mxu0 0.0
    %339 = vmatprep.subr.mxu0 0.0
    %340 = vmatpush1.msra.mxu0 0.0
    %341 = vmatprep.subr.mxu0 0.0
    %342 = vmatpush1.msra.mxu0 0.0
    %343 = vmatprep.subr.mxu0 0.0
    %344 = vmatpush1.msra.mxu0 0.0
    %345 = vmatprep.subr.mxu0 0.0
    %346 = vmatpush1.msra.mxu0 0.0
    %347 = vmatprep.subr.mxu0 0.0
    %348 = vmatpush1.msra.mxu0 0.0
    %349 = vmatprep.subr.mxu0 0.0
    %350 = vmatpush1.msra.mxu0 0.0
    %351 = vmatprep.subr.mxu0 0.0
    %352 = vmatpush1.msra.mxu0 0.0
    %353 = vmatprep.subr.mxu0 0.0
    %354 = vmatpush1.msra.mxu0 0.0
    %355 = vmatprep.subr.mxu0 0.0
    %356 = vmatpush1.msra.mxu0 0.0
    %357 = vmatprep.subr.mxu0 0.0
    %358 = vmatpush1.msra.mxu0 0.0
    %359 = vmatprep.subr.mxu0 0.0
    %360 = vmatpush1.msra.mxu0 0.0
    %361 = vmatprep.subr.mxu0 0.0
    %362 = vmatpush1.msra.mxu0 0.0
    %363 = vmatprep.subr.mxu0 0.0
    %364 = vmatpush1.msra.mxu0 0.0
    %365 = vmatprep.subr.mxu0 0.0
    %366 = vmatpush1.msra.mxu0 0.0
    %367 = vmatprep.subr.mxu0 0.0
    %368 = vmatpush1.msra.mxu0 0.0
    %369 = vmatprep.mubr.f32.mxu0 0.0
    %370 = vmatmul.mubr.f32.gmra.mrb[0].mxu0 %v303
    %v371 = vpop.f32.mrb[0].mxu0
    %v372 = vadd.f32 0.0, %v371
    %v373 = vpop.f32.mrb[0].mxu0
    %374 = vdwg.mxu0
    %s375 = scalar_lea.vmem [#allocation3], 24
    %v376 = vld [vmem:[%s375] sm:$0xf]
    %v377 = vld [vmem:[%s375 + $0x4] sm:$0xf]
    %v378 = vld [vmem:[%s375 + $0x8] sm:$0xf]
    %v379 = vunpack.c.l.bf16 %v376
    %v380 = vunpack.c.l.bf16 %v377
    %v381 = vunpack.c.l.bf16 %v378
    %v382 = vadd.f32 %v379, %v372
    %v383 = vmul.f32 %v382, 0.5
    %v384 = vtanh.pop %v383
    %v385 = vadd.f32 %v384, 1.0
    %v386 = vmul.f32 %v385, 0.5
    %388 = vrot.lane.b32.xlu0 %v372, 96
    %v389 = vpop.permute.xlu0 %388
    %v391 = vadd.f32 %v380, %v389
    %v392 = vmul.f32 %v391, 0.5
    %v393 = vtanh.pop %v392
    %v394 = vadd.f32 %v393, 1.0
    %v395 = vmul.f32 %v394, 0.5
    %397 = vrot.lane.b32.xlu0 %v395, 64
    %v398 = vpop.permute.xlu0 %397
    %v400 = vmul.f32 %v372, %v398
    %402 = vrot.lane.b32.xlu0 %v400, 64
    %v403 = vpop.permute.xlu0 %402
    %v405 = vadd.f32 %v381, %v403
    %v406 = vtanh.pop %v405
    %s407 = scalar_lea.vmem %s1, 16
    %v408 = vld [vmem:[%s407] sm:$0xff]
    %410 = vset.pattern.permute.xlu0 0
    %411 = vperm.xlu0 %410, %v408
    %v412 = vpop.permute.xlu0 %411
    %v414 = vmul.f32 %v412, %v386
    %v415 = vsub.f32 1.0, %v414
    %v416 = vmul.f32 %v415, %v288
    %v417 = vmul.f32 %v414, %v406
    %v418 = vadd.f32 %v416, %v417
    %s419 = sadd.s32 %s32, 2
    %v420 = vstv %s419
    %vm421 = vcmp.gt.s32.totalorder %v39, %v420
    %v422 = vsel %vm421, 1, 0
    %v423 = vcvt.s32.f32 %v422
    %425 = vset.pattern.permute.xlu0 0
    %426 = vperm.xlu0 %425, %v423
    %v427 = vpop.permute.xlu0 %426
    %v429 = vmul.f32 %v418, %v427
    %s430 = scalar_lea.vmem [#allocation6], 16
    %431 = vst.msk [vmem:[%s430] sm:$0xff] %vm45, %v429
    %v433 = vsel %vm45, %v418, 0
    %435 = vmatprep.subr.mxu0 0.0
    %436 = vmatpush1.msra.mxu0 %v40
    %437 = vmatprep.subr.mxu0 0.0
    %438 = vmatpush1.msra.mxu0 %v41
    %439 = vmatprep.subr.mxu0 0.0
    %440 = vmatpush1.msra.mxu0 %v42
    %441 = vmatprep.subr.mxu0 0.0
    %442 = vmatpush1.msra.mxu0 %v43
    %443 = vmatprep.subr.mxu0 0.0
    %444 = vmatpush1.msra.mxu0 0.0
    %445 = vmatprep.subr.mxu0 0.0
    %446 = vmatpush1.msra.mxu0 0.0
    %447 = vmatprep.subr.mxu0 0.0
    %448 = vmatpush1.msra.mxu0 0.0
    %449 = vmatprep.subr.mxu0 0.0
    %450 = vmatpush1.msra.mxu0 0.0
    %451 = vmatprep.subr.mxu0 0.0
    %452 = vmatpush1.msra.mxu0 0.0
    %453 = vmatprep.subr.mxu0 0.0
    %454 = vmatpush1.msra.mxu0 0.0
    %455 = vmatprep.subr.mxu0 0.0
    %456 = vmatpush1.msra.mxu0 0.0
    %457 = vmatprep.subr.mxu0 0.0
    %458 = vmatpush1.msra.mxu0 0.0
    %459 = vmatprep.subr.mxu0 0.0
    %460 = vmatpush1.msra.mxu0 0.0
    %461 = vmatprep.subr.mxu0 0.0
    %462 = vmatpush1.msra.mxu0 0.0
    %463 = vmatprep.subr.mxu0 0.0
    %464 = vmatpush1.msra.mxu0 0.0
    %465 = vmatprep.subr.mxu0 0.0
    %466 = vmatpush1.msra.mxu0 0.0
    %467 = vmatprep.subr.mxu0 0.0
    %468 = vmatpush1.msra.mxu0 0.0
    %469 = vmatprep.subr.mxu0 0.0
    %470 = vmatpush1.msra.mxu0 0.0
    %471 = vmatprep.subr.mxu0 0.0
    %472 = vmatpush1.msra.mxu0 0.0
    %473 = vmatprep.subr.mxu0 0.0
    %474 = vmatpush1.msra.mxu0 0.0
    %475 = vmatprep.subr.mxu0 0.0
    %476 = vmatpush1.msra.mxu0 0.0
    %477 = vmatprep.subr.mxu0 0.0
    %478 = vmatpush1.msra.mxu0 0.0
    %479 = vmatprep.subr.mxu0 0.0
    %480 = vmatpush1.msra.mxu0 0.0
    %481 = vmatprep.subr.mxu0 0.0
    %482 = vmatpush1.msra.mxu0 0.0
    %483 = vmatprep.subr.mxu0 0.0
    %484 = vmatpush1.msra.mxu0 0.0
    %485 = vmatprep.subr.mxu0 0.0
    %486 = vmatpush1.msra.mxu0 0.0
    %487 = vmatprep.subr.mxu0 0.0
    %488 = vmatpush1.msra.mxu0 0.0
    %489 = vmatprep.subr.mxu0 0.0
    %490 = vmatpush1.msra.mxu0 0.0
    %491 = vmatprep.subr.mxu0 0.0
    %492 = vmatpush1.msra.mxu0 0.0
    %493 = vmatprep.subr.mxu0 0.0
    %494 = vmatpush1.msra.mxu0 0.0
    %495 = vmatprep.subr.mxu0 0.0
    %496 = vmatpush1.msra.mxu0 0.0
    %497 = vmatprep.subr.mxu0 0.0
    %498 = vmatpush1.msra.mxu0 0.0
    %499 = vmatprep.mubr.f32.mxu0 0.0
    %500 = vmatmul.mubr.f32.gmra.mrb[0].mxu0 %v433
    %v501 = vpop.f32.mrb[0].mxu0
    %v502 = vadd.f32 0.0, %v501
    %v503 = vpop.f32.mrb[0].mxu0
    %504 = vdwg.mxu0
    %s505 = scalar_lea.vmem [#allocation3], 36
    %v506 = vld [vmem:[%s505] sm:$0xf]
    %v507 = vld [vmem:[%s505 + $0x4] sm:$0xf]
    %v508 = vld [vmem:[%s505 + $0x8] sm:$0xf]
    %v509 = vunpack.c.l.bf16 %v506
    %v510 = vunpack.c.l.bf16 %v507
    %v511 = vunpack.c.l.bf16 %v508
    %v512 = vadd.f32 %v509, %v502
    %v513 = vmul.f32 %v512, 0.5
    %v514 = vtanh.pop %v513
    %v515 = vadd.f32 %v514, 1.0
    %v516 = vmul.f32 %v515, 0.5
    %518 = vrot.lane.b32.xlu0 %v502, 96
    %v519 = vpop.permute.xlu0 %518
    %v521 = vadd.f32 %v510, %v519
    %v522 = vmul.f32 %v521, 0.5
    %v523 = vtanh.pop %v522
    %v524 = vadd.f32 %v523, 1.0
    %v525 = vmul.f32 %v524, 0.5
    %527 = vrot.lane.b32.xlu0 %v525, 64
    %v528 = vpop.permute.xlu0 %527
    %v530 = vmul.f32 %v502, %v528
    %532 = vrot.lane.b32.xlu0 %v530, 64
    %v533 = vpop.permute.xlu0 %532
    %v535 = vadd.f32 %v511, %v533
    %v536 = vtanh.pop %v535
    %s537 = scalar_lea.vmem %s1, 24
    %v538 = vld [vmem:[%s537] sm:$0xff]
    %540 = vset.pattern.permute.xlu0 0
    %541 = vperm.xlu0 %540, %v538
    %v542 = vpop.permute.xlu0 %541
    %v544 = vmul.f32 %v542, %v516
    %v545 = vsub.f32 1.0, %v544
    %v546 = vmul.f32 %v545, %v418
    %v547 = vmul.f32 %v544, %v536
    %v548 = vadd.f32 %v546, %v547
    %s549 = sadd.s32 %s32, 3
    %v550 = vstv %s549
    %vm551 = vcmp.gt.s32.totalorder %v39, %v550
    %v552 = vsel %vm551, 1, 0
    %v553 = vcvt.s32.f32 %v552
    %555 = vset.pattern.permute.xlu0 0
    %556 = vperm.xlu0 %555, %v553
    %v557 = vpop.permute.xlu0 %556
    %v559 = vmul.f32 %v548, %v557
    %s560 = scalar_lea.vmem [#allocation6], 24
    %561 = vst.msk [vmem:[%s560] sm:$0xff] %vm45, %v559
    %v563 = vsel %vm45, %v548, 0
    %565 = vmatprep.subr.mxu0 0.0
    %566 = vmatpush1.msra.mxu0 %v40
    %567 = vmatprep.subr.mxu0 0.0
    %568 = vmatpush1.msra.mxu0 %v41
    %569 = vmatprep.subr.mxu0 0.0
    %570 = vmatpush1.msra.mxu0 %v42
    %571 = vmatprep.subr.mxu0 0.0
    %572 = vmatpush1.msra.mxu0 %v43
    %573 = vmatprep.subr.mxu0 0.0
    %574 = vmatpush1.msra.mxu0 0.0
    %575 = vmatprep.subr.mxu0 0.0
    %576 = vmatpush1.msra.mxu0 0.0
    %577 = vmatprep.subr.mxu0 0.0
    %578 = vmatpush1.msra.mxu0 0.0
    %579 = vmatprep.subr.mxu0 0.0
    %580 = vmatpush1.msra.mxu0 0.0
    %581 = vmatprep.subr.mxu0 0.0
    %582 = vmatpush1.msra.mxu0 0.0
    %583 = vmatprep.subr.mxu0 0.0
    %584 = vmatpush1.msra.mxu0 0.0
    %585 = vmatprep.subr.mxu0 0.0
    %586 = vmatpush1.msra.mxu0 0.0
    %587 = vmatprep.subr.mxu0 0.0
    %588 = vmatpush1.msra.mxu0 0.0
    %589 = vmatprep.subr.mxu0 0.0
    %590 = vmatpush1.msra.mxu0 0.0
    %591 = vmatprep.subr.mxu0 0.0
    %592 = vmatpush1.msra.mxu0 0.0
    %593 = vmatprep.subr.mxu0 0.0
    %594 = vmatpush1.msra.mxu0 0.0
    %595 = vmatprep.subr.mxu0 0.0
    %596 = vmatpush1.msra.mxu0 0.0
    %597 = vmatprep.subr.mxu0 0.0
    %598 = vmatpush1.msra.mxu0 0.0
    %599 = vmatprep.subr.mxu0 0.0
    %600 = vmatpush1.msra.mxu0 0.0
    %601 = vmatprep.subr.mxu0 0.0
    %602 = vmatpush1.msra.mxu0 0.0
    %603 = vmatprep.subr.mxu0 0.0
    %604 = vmatpush1.msra.mxu0 0.0
    %605 = vmatprep.subr.mxu0 0.0
    %606 = vmatpush1.msra.mxu0 0.0
    %607 = vmatprep.subr.mxu0 0.0
    %608 = vmatpush1.msra.mxu0 0.0
    %609 = vmatprep.subr.mxu0 0.0
    %610 = vmatpush1.msra.mxu0 0.0
    %611 = vmatprep.subr.mxu0 0.0
    %612 = vmatpush1.msra.mxu0 0.0
    %613 = vmatprep.subr.mxu0 0.0
    %614 = vmatpush1.msra.mxu0 0.0
    %615 = vmatprep.subr.mxu0 0.0
    %616 = vmatpush1.msra.mxu0 0.0
    %617 = vmatprep.subr.mxu0 0.0
    %618 = vmatpush1.msra.mxu0 0.0
    %619 = vmatprep.subr.mxu0 0.0
    %620 = vmatpush1.msra.mxu0 0.0
    %621 = vmatprep.subr.mxu0 0.0
    %622 = vmatpush1.msra.mxu0 0.0
    %623 = vmatprep.subr.mxu0 0.0
    %624 = vmatpush1.msra.mxu0 0.0
    %625 = vmatprep.subr.mxu0 0.0
    %626 = vmatpush1.msra.mxu0 0.0
    %627 = vmatprep.subr.mxu0 0.0
    %628 = vmatpush1.msra.mxu0 0.0
    %629 = vmatprep.mubr.f32.mxu0 0.0
    %630 = vmatmul.mubr.f32.gmra.mrb[0].mxu0 %v563
    %v631 = vpop.f32.mrb[0].mxu0
    %v632 = vadd.f32 0.0, %v631
    %v633 = vpop.f32.mrb[0].mxu0
    %634 = vdwg.mxu0
    %s635 = scalar_lea.vmem [#allocation3], 48
    %v636 = vld [vmem:[%s635] sm:$0xf]
    %v637 = vld [vmem:[%s635 + $0x4] sm:$0xf]
    %v638 = vld [vmem:[%s635 + $0x8] sm:$0xf]
    %v639 = vunpack.c.l.bf16 %v636
    %v640 = vunpack.c.l.bf16 %v637
    %v641 = vunpack.c.l.bf16 %v638
    %v642 = vadd.f32 %v639, %v632
    %v643 = vmul.f32 %v642, 0.5
    %v644 = vtanh.pop %v643
    %v645 = vadd.f32 %v644, 1.0
    %v646 = vmul.f32 %v645, 0.5
    %648 = vrot.lane.b32.xlu0 %v632, 96
    %v649 = vpop.permute.xlu0 %648
    %v651 = vadd.f32 %v640, %v649
    %v652 = vmul.f32 %v651, 0.5
    %v653 = vtanh.pop %v652
    %v654 = vadd.f32 %v653, 1.0
    %v655 = vmul.f32 %v654, 0.5
    %657 = vrot.lane.b32.xlu0 %v655, 64
    %v658 = vpop.permute.xlu0 %657
    %v660 = vmul.f32 %v632, %v658
    %662 = vrot.lane.b32.xlu0 %v660, 64
    %v663 = vpop.permute.xlu0 %662
    %v665 = vadd.f32 %v641, %v663
    %v666 = vtanh.pop %v665
    %s667 = scalar_lea.vmem %s1, 32
    %v668 = vld [vmem:[%s667] sm:$0xff]
    %670 = vset.pattern.permute.xlu0 0
    %671 = vperm.xlu0 %670, %v668
    %v672 = vpop.permute.xlu0 %671
    %v674 = vmul.f32 %v672, %v646
    %v675 = vsub.f32 1.0, %v674
    %v676 = vmul.f32 %v675, %v548
    %v677 = vmul.f32 %v674, %v666
    %v678 = vadd.f32 %v676, %v677
    %s679 = sadd.s32 %s32, 4
    %v680 = vstv %s679
    %vm681 = vcmp.gt.s32.totalorder %v39, %v680
    %v682 = vsel %vm681, 1, 0
    %v683 = vcvt.s32.f32 %v682
    %685 = vset.pattern.permute.xlu0 0
    %686 = vperm.xlu0 %685, %v683
    %v687 = vpop.permute.xlu0 %686
    %v689 = vmul.f32 %v678, %v687
    %s690 = scalar_lea.vmem [#allocation6], 32
    %691 = vst.msk [vmem:[%s690] sm:$0xff] %vm45, %v689
    %v693 = vsel %vm45, %v678, 0
    %695 = vmatprep.subr.mxu0 0.0
    %696 = vmatpush1.msra.mxu0 %v40
    %697 = vmatprep.subr.mxu0 0.0
    %698 = vmatpush1.msra.mxu0 %v41
    %699 = vmatprep.subr.mxu0 0.0
    %700 = vmatpush1.msra.mxu0 %v42
    %701 = vmatprep.subr.mxu0 0.0
    %702 = vmatpush1.msra.mxu0 %v43
    %703 = vmatprep.subr.mxu0 0.0
    %704 = vmatpush1.msra.mxu0 0.0
    %705 = vmatprep.subr.mxu0 0.0
    %706 = vmatpush1.msra.mxu0 0.0
    %707 = vmatprep.subr.mxu0 0.0
    %708 = vmatpush1.msra.mxu0 0.0
    %709 = vmatprep.subr.mxu0 0.0
    %710 = vmatpush1.msra.mxu0 0.0
    %711 = vmatprep.subr.mxu0 0.0
    %712 = vmatpush1.msra.mxu0 0.0
    %713 = vmatprep.subr.mxu0 0.0
    %714 = vmatpush1.msra.mxu0 0.0
    %715 = vmatprep.subr.mxu0 0.0
    %716 = vmatpush1.msra.mxu0 0.0
    %717 = vmatprep.subr.mxu0 0.0
    %718 = vmatpush1.msra.mxu0 0.0
    %719 = vmatprep.subr.mxu0 0.0
    %720 = vmatpush1.msra.mxu0 0.0
    %721 = vmatprep.subr.mxu0 0.0
    %722 = vmatpush1.msra.mxu0 0.0
    %723 = vmatprep.subr.mxu0 0.0
    %724 = vmatpush1.msra.mxu0 0.0
    %725 = vmatprep.subr.mxu0 0.0
    %726 = vmatpush1.msra.mxu0 0.0
    %727 = vmatprep.subr.mxu0 0.0
    %728 = vmatpush1.msra.mxu0 0.0
    %729 = vmatprep.subr.mxu0 0.0
    %730 = vmatpush1.msra.mxu0 0.0
    %731 = vmatprep.subr.mxu0 0.0
    %732 = vmatpush1.msra.mxu0 0.0
    %733 = vmatprep.subr.mxu0 0.0
    %734 = vmatpush1.msra.mxu0 0.0
    %735 = vmatprep.subr.mxu0 0.0
    %736 = vmatpush1.msra.mxu0 0.0
    %737 = vmatprep.subr.mxu0 0.0
    %738 = vmatpush1.msra.mxu0 0.0
    %739 = vmatprep.subr.mxu0 0.0
    %740 = vmatpush1.msra.mxu0 0.0
    %741 = vmatprep.subr.mxu0 0.0
    %742 = vmatpush1.msra.mxu0 0.0
    %743 = vmatprep.subr.mxu0 0.0
    %744 = vmatpush1.msra.mxu0 0.0
    %745 = vmatprep.subr.mxu0 0.0
    %746 = vmatpush1.msra.mxu0 0.0
    %747 = vmatprep.subr.mxu0 0.0
    %748 = vmatpush1.msra.mxu0 0.0
    %749 = vmatprep.subr.mxu0 0.0
    %750 = vmatpush1.msra.mxu0 0.0
    %751 = vmatprep.subr.mxu0 0.0
    %752 = vmatpush1.msra.mxu0 0.0
    %753 = vmatprep.subr.mxu0 0.0
    %754 = vmatpush1.msra.mxu0 0.0
    %755 = vmatprep.subr.mxu0 0.0
    %756 = vmatpush1.msra.mxu0 0.0
    %757 = vmatprep.subr.mxu0 0.0
    %758 = vmatpush1.msra.mxu0 0.0
    %759 = vmatprep.mubr.f32.mxu0 0.0
    %760 = vmatmul.mubr.f32.gmra.mrb[0].mxu0 %v693
    %v761 = vpop.f32.mrb[0].mxu0
    %v762 = vadd.f32 0.0, %v761
    %v763 = vpop.f32.mrb[0].mxu0
    %764 = vdwg.mxu0
    %s765 = scalar_lea.vmem [#allocation3], 60
    %v766 = vld [vmem:[%s765] sm:$0xf]
    %v767 = vld [vmem:[%s765 + $0x4] sm:$0xf]
    %v768 = vld [vmem:[%s765 + $0x8] sm:$0xf]
    %v769 = vunpack.c.l.bf16 %v766
    %v770 = vunpack.c.l.bf16 %v767
    %v771 = vunpack.c.l.bf16 %v768
    %v772 = vadd.f32 %v769, %v762
    %v773 = vmul.f32 %v772, 0.5
    %v774 = vtanh.pop %v773
    %v775 = vadd.f32 %v774, 1.0
    %v776 = vmul.f32 %v775, 0.5
    %778 = vrot.lane.b32.xlu0 %v762, 96
    %v779 = vpop.permute.xlu0 %778
    %v781 = vadd.f32 %v770, %v779
    %v782 = vmul.f32 %v781, 0.5
    %v783 = vtanh.pop %v782
    %v784 = vadd.f32 %v783, 1.0
    %v785 = vmul.f32 %v784, 0.5
    %787 = vrot.lane.b32.xlu0 %v785, 64
    %v788 = vpop.permute.xlu0 %787
    %v790 = vmul.f32 %v762, %v788
    %792 = vrot.lane.b32.xlu0 %v790, 64
    %v793 = vpop.permute.xlu0 %792
    %v795 = vadd.f32 %v771, %v793
    %v796 = vtanh.pop %v795
    %s797 = scalar_lea.vmem %s1, 40
    %v798 = vld [vmem:[%s797] sm:$0xff]
    %800 = vset.pattern.permute.xlu0 0
    %801 = vperm.xlu0 %800, %v798
    %v802 = vpop.permute.xlu0 %801
    %v804 = vmul.f32 %v802, %v776
    %v805 = vsub.f32 1.0, %v804
    %v806 = vmul.f32 %v805, %v678
    %v807 = vmul.f32 %v804, %v796
    %v808 = vadd.f32 %v806, %v807
    %s809 = sadd.s32 %s32, 5
    %v810 = vstv %s809
    %vm811 = vcmp.gt.s32.totalorder %v39, %v810
    %v812 = vsel %vm811, 1, 0
    %v813 = vcvt.s32.f32 %v812
    %815 = vset.pattern.permute.xlu0 0
    %816 = vperm.xlu0 %815, %v813
    %v817 = vpop.permute.xlu0 %816
    %v819 = vmul.f32 %v808, %v817
    %s820 = scalar_lea.vmem [#allocation6], 40
    %821 = vst.msk [vmem:[%s820] sm:$0xff] %vm45, %v819
    %v823 = vsel %vm45, %v808, 0
    %825 = vmatprep.subr.mxu0 0.0
    %826 = vmatpush1.msra.mxu0 %v40
    %827 = vmatprep.subr.mxu0 0.0
    %828 = vmatpush1.msra.mxu0 %v41
    %829 = vmatprep.subr.mxu0 0.0
    %830 = vmatpush1.msra.mxu0 %v42
    %831 = vmatprep.subr.mxu0 0.0
    %832 = vmatpush1.msra.mxu0 %v43
    %833 = vmatprep.subr.mxu0 0.0
    %834 = vmatpush1.msra.mxu0 0.0
    %835 = vmatprep.subr.mxu0 0.0
    %836 = vmatpush1.msra.mxu0 0.0
    %837 = vmatprep.subr.mxu0 0.0
    %838 = vmatpush1.msra.mxu0 0.0
    %839 = vmatprep.subr.mxu0 0.0
    %840 = vmatpush1.msra.mxu0 0.0
    %841 = vmatprep.subr.mxu0 0.0
    %842 = vmatpush1.msra.mxu0 0.0
    %843 = vmatprep.subr.mxu0 0.0
    %844 = vmatpush1.msra.mxu0 0.0
    %845 = vmatprep.subr.mxu0 0.0
    %846 = vmatpush1.msra.mxu0 0.0
    %847 = vmatprep.subr.mxu0 0.0
    %848 = vmatpush1.msra.mxu0 0.0
    %849 = vmatprep.subr.mxu0 0.0
    %850 = vmatpush1.msra.mxu0 0.0
    %851 = vmatprep.subr.mxu0 0.0
    %852 = vmatpush1.msra.mxu0 0.0
    %853 = vmatprep.subr.mxu0 0.0
    %854 = vmatpush1.msra.mxu0 0.0
    %855 = vmatprep.subr.mxu0 0.0
    %856 = vmatpush1.msra.mxu0 0.0
    %857 = vmatprep.subr.mxu0 0.0
    %858 = vmatpush1.msra.mxu0 0.0
    %859 = vmatprep.subr.mxu0 0.0
    %860 = vmatpush1.msra.mxu0 0.0
    %861 = vmatprep.subr.mxu0 0.0
    %862 = vmatpush1.msra.mxu0 0.0
    %863 = vmatprep.subr.mxu0 0.0
    %864 = vmatpush1.msra.mxu0 0.0
    %865 = vmatprep.subr.mxu0 0.0
    %866 = vmatpush1.msra.mxu0 0.0
    %867 = vmatprep.subr.mxu0 0.0
    %868 = vmatpush1.msra.mxu0 0.0
    %869 = vmatprep.subr.mxu0 0.0
    %870 = vmatpush1.msra.mxu0 0.0
    %871 = vmatprep.subr.mxu0 0.0
    %872 = vmatpush1.msra.mxu0 0.0
    %873 = vmatprep.subr.mxu0 0.0
    %874 = vmatpush1.msra.mxu0 0.0
    %875 = vmatprep.subr.mxu0 0.0
    %876 = vmatpush1.msra.mxu0 0.0
    %877 = vmatprep.subr.mxu0 0.0
    %878 = vmatpush1.msra.mxu0 0.0
    %879 = vmatprep.subr.mxu0 0.0
    %880 = vmatpush1.msra.mxu0 0.0
    %881 = vmatprep.subr.mxu0 0.0
    %882 = vmatpush1.msra.mxu0 0.0
    %883 = vmatprep.subr.mxu0 0.0
    %884 = vmatpush1.msra.mxu0 0.0
    %885 = vmatprep.subr.mxu0 0.0
    %886 = vmatpush1.msra.mxu0 0.0
    %887 = vmatprep.subr.mxu0 0.0
    %888 = vmatpush1.msra.mxu0 0.0
    %889 = vmatprep.mubr.f32.mxu0 0.0
    %890 = vmatmul.mubr.f32.gmra.mrb[0].mxu0 %v823
    %v891 = vpop.f32.mrb[0].mxu0
    %v892 = vadd.f32 0.0, %v891
    %v893 = vpop.f32.mrb[0].mxu0
    %894 = vdwg.mxu0
    %s895 = scalar_lea.vmem [#allocation3], 72
    %v896 = vld [vmem:[%s895] sm:$0xf]
    %v897 = vld [vmem:[%s895 + $0x4] sm:$0xf]
    %v898 = vld [vmem:[%s895 + $0x8] sm:$0xf]
    %v899 = vunpack.c.l.bf16 %v896
    %v900 = vunpack.c.l.bf16 %v897
    %v901 = vunpack.c.l.bf16 %v898
    %v902 = vadd.f32 %v899, %v892
    %v903 = vmul.f32 %v902, 0.5
    %v904 = vtanh.pop %v903
    %v905 = vadd.f32 %v904, 1.0
    %v906 = vmul.f32 %v905, 0.5
    %908 = vrot.lane.b32.xlu0 %v892, 96
    %v909 = vpop.permute.xlu0 %908
    %v911 = vadd.f32 %v900, %v909
    %v912 = vmul.f32 %v911, 0.5
    %v913 = vtanh.pop %v912
    %v914 = vadd.f32 %v913, 1.0
    %v915 = vmul.f32 %v914, 0.5
    %917 = vrot.lane.b32.xlu0 %v915, 64
    %v918 = vpop.permute.xlu0 %917
    %v920 = vmul.f32 %v892, %v918
    %922 = vrot.lane.b32.xlu0 %v920, 64
    %v923 = vpop.permute.xlu0 %922
    %v925 = vadd.f32 %v901, %v923
    %v926 = vtanh.pop %v925
    %s927 = scalar_lea.vmem %s1, 48
    %v928 = vld [vmem:[%s927] sm:$0xff]
    %930 = vset.pattern.permute.xlu0 0
    %931 = vperm.xlu0 %930, %v928
    %v932 = vpop.permute.xlu0 %931
    %v934 = vmul.f32 %v932, %v906
    %v935 = vsub.f32 1.0, %v934
    %v936 = vmul.f32 %v935, %v808
    %v937 = vmul.f32 %v934, %v926
    %v938 = vadd.f32 %v936, %v937
    %s939 = sadd.s32 %s32, 6
    %v940 = vstv %s939
    %vm941 = vcmp.gt.s32.totalorder %v39, %v940
    %v942 = vsel %vm941, 1, 0
    %v943 = vcvt.s32.f32 %v942
    %945 = vset.pattern.permute.xlu0 0
    %946 = vperm.xlu0 %945, %v943
    %v947 = vpop.permute.xlu0 %946
    %v949 = vmul.f32 %v938, %v947
    %s950 = scalar_lea.vmem [#allocation6], 48
    %951 = vst.msk [vmem:[%s950] sm:$0xff] %vm45, %v949
    %v953 = vsel %vm45, %v938, 0
    %955 = vmatprep.subr.mxu0 0.0
    %956 = vmatpush1.msra.mxu0 %v40
    %957 = vmatprep.subr.mxu0 0.0
    %958 = vmatpush1.msra.mxu0 %v41
    %959 = vmatprep.subr.mxu0 0.0
    %960 = vmatpush1.msra.mxu0 %v42
    %961 = vmatprep.subr.mxu0 0.0
    %962 = vmatpush1.msra.mxu0 %v43
    %963 = vmatprep.subr.mxu0 0.0
    %964 = vmatpush1.msra.mxu0 0.0
    %965 = vmatprep.subr.mxu0 0.0
    %966 = vmatpush1.msra.mxu0 0.0
    %967 = vmatprep.subr.mxu0 0.0
    %968 = vmatpush1.msra.mxu0 0.0
    %969 = vmatprep.subr.mxu0 0.0
    %970 = vmatpush1.msra.mxu0 0.0
    %971 = vmatprep.subr.mxu0 0.0
    %972 = vmatpush1.msra.mxu0 0.0
    %973 = vmatprep.subr.mxu0 0.0
    %974 = vmatpush1.msra.mxu0 0.0
    %975 = vmatprep.subr.mxu0 0.0
    %976 = vmatpush1.msra.mxu0 0.0
    %977 = vmatprep.subr.mxu0 0.0
    %978 = vmatpush1.msra.mxu0 0.0
    %979 = vmatprep.subr.mxu0 0.0
    %980 = vmatpush1.msra.mxu0 0.0
    %981 = vmatprep.subr.mxu0 0.0
    %982 = vmatpush1.msra.mxu0 0.0
    %983 = vmatprep.subr.mxu0 0.0
    %984 = vmatpush1.msra.mxu0 0.0
    %985 = vmatprep.subr.mxu0 0.0
    %986 = vmatpush1.msra.mxu0 0.0
    %987 = vmatprep.subr.mxu0 0.0
    %988 = vmatpush1.msra.mxu0 0.0
    %989 = vmatprep.subr.mxu0 0.0
    %990 = vmatpush1.msra.mxu0 0.0
    %991 = vmatprep.subr.mxu0 0.0
    %992 = vmatpush1.msra.mxu0 0.0
    %993 = vmatprep.subr.mxu0 0.0
    %994 = vmatpush1.msra.mxu0 0.0
    %995 = vmatprep.subr.mxu0 0.0
    %996 = vmatpush1.msra.mxu0 0.0
    %997 = vmatprep.subr.mxu0 0.0
    %998 = vmatpush1.msra.mxu0 0.0
    %999 = vmatprep.subr.mxu0 0.0
    %1000 = vmatpush1.msra.mxu0 0.0
    %1001 = vmatprep.subr.mxu0 0.0
    %1002 = vmatpush1.msra.mxu0 0.0
    %1003 = vmatprep.subr.mxu0 0.0
    %1004 = vmatpush1.msra.mxu0 0.0
    %1005 = vmatprep.subr.mxu0 0.0
    %1006 = vmatpush1.msra.mxu0 0.0
    %1007 = vmatprep.subr.mxu0 0.0
    %1008 = vmatpush1.msra.mxu0 0.0
    %1009 = vmatprep.subr.mxu0 0.0
    %1010 = vmatpush1.msra.mxu0 0.0
    %1011 = vmatprep.subr.mxu0 0.0
    %1012 = vmatpush1.msra.mxu0 0.0
    %1013 = vmatprep.subr.mxu0 0.0
    %1014 = vmatpush1.msra.mxu0 0.0
    %1015 = vmatprep.subr.mxu0 0.0
    %1016 = vmatpush1.msra.mxu0 0.0
    %1017 = vmatprep.subr.mxu0 0.0
    %1018 = vmatpush1.msra.mxu0 0.0
    %1019 = vmatprep.mubr.f32.mxu0 0.0
    %1020 = vmatmul.mubr.f32.gmra.mrb[0].mxu0 %v953
    %v1021 = vpop.f32.mrb[0].mxu0
    %v1022 = vadd.f32 0.0, %v1021
    %v1023 = vpop.f32.mrb[0].mxu0
    %1024 = vdwg.mxu0
    %s1025 = scalar_lea.vmem [#allocation3], 84
    %v1026 = vld [vmem:[%s1025] sm:$0xf]
    %v1027 = vld [vmem:[%s1025 + $0x4] sm:$0xf]
    %v1028 = vld [vmem:[%s1025 + $0x8] sm:$0xf]
    %v1029 = vunpack.c.l.bf16 %v1026
    %v1030 = vunpack.c.l.bf16 %v1027
    %v1031 = vunpack.c.l.bf16 %v1028
    %v1032 = vadd.f32 %v1029, %v1022
    %v1033 = vmul.f32 %v1032, 0.5
    %v1034 = vtanh.pop %v1033
    %v1035 = vadd.f32 %v1034, 1.0
    %v1036 = vmul.f32 %v1035, 0.5
    %1038 = vrot.lane.b32.xlu0 %v1022, 96
    %v1039 = vpop.permute.xlu0 %1038
    %v1041 = vadd.f32 %v1030, %v1039
    %v1042 = vmul.f32 %v1041, 0.5
    %v1043 = vtanh.pop %v1042
    %v1044 = vadd.f32 %v1043, 1.0
    %v1045 = vmul.f32 %v1044, 0.5
    %1047 = vrot.lane.b32.xlu0 %v1045, 64
    %v1048 = vpop.permute.xlu0 %1047
    %v1050 = vmul.f32 %v1022, %v1048
    %1052 = vrot.lane.b32.xlu0 %v1050, 64
    %v1053 = vpop.permute.xlu0 %1052
    %v1055 = vadd.f32 %v1031, %v1053
    %v1056 = vtanh.pop %v1055
    %s1057 = scalar_lea.vmem %s1, 56
    %v1058 = vld [vmem:[%s1057] sm:$0xff]
    %1060 = vset.pattern.permute.xlu0 0
    %1061 = vperm.xlu0 %1060, %v1058
    %v1062 = vpop.permute.xlu0 %1061
    %v1064 = vmul.f32 %v1062, %v1036
    %v1065 = vsub.f32 1.0, %v1064
    %v1066 = vmul.f32 %v1065, %v938
    %v1067 = vmul.f32 %v1064, %v1056
    %v1068 = vadd.f32 %v1066, %v1067
    %s1069 = sadd.s32 %s32, 7
    %v1070 = vstv %s1069
    %vm1071 = vcmp.gt.s32.totalorder %v39, %v1070
    %v1072 = vsel %vm1071, 1, 0
    %v1073 = vcvt.s32.f32 %v1072
    %1075 = vset.pattern.permute.xlu0 0
    %1076 = vperm.xlu0 %1075, %v1073
    %v1077 = vpop.permute.xlu0 %1076
    %v1079 = vmul.f32 %v1068, %v1077
    %s1080 = scalar_lea.vmem [#allocation6], 56
    %1081 = vst.msk [vmem:[%s1080] sm:$0xff] %vm45, %v1079
    %1082 = vst.msk [vmem:[#allocation2] sm:$0xff] %vm45, %v1068
    // Predicated region
    $region26: #{tpu_custom_call.1} parent=1 // pred_check
      _
    $region27: #{tpu_custom_call.1} parent=1 // pred_check_branch
      %1084 = sbr.rel (0) target = $region29
    $region28: #{tpu_custom_call.1} parent=1 // pred_region
      %s1086 = ssub.s32 1024, 1024
      %1087 = vsyncadd [#allocation5], %s1086
      %s1088 = sshll.u32 [#allocation6], 4
      %s1089 = int_to_ptr.vmem [resolvable:$true] %s1088
      %1094 = dma.vmem_to_hbm [thread:$0]  %s1089, 1024, %s4, [#allocation5], 128, 128, 8
    $region29: #{tpu_custom_call.1} parent=1 // pred_fallthru
      _
    // Predicated region
    $region30: #{tpu_custom_call.1} parent=1 // pred_check
      _
    $region31: #{tpu_custom_call.1} parent=1 // pred_check_branch
      %1096 = sbr.rel (0) target = $region33
    $region32: #{tpu_custom_call.1} parent=1 // pred_region
      %1097 = dma.done [#allocation5], 1024
    $region33: #{tpu_custom_call.1} parent=1 // pred_fallthru
      _
    %1098 = vsyncpa [#allocation4], 1
    %1099 = vsyncpa [#allocation5], 1

</llo_original>
